<compile_context>
chip_gen: v5e
topology: v5e:2x2
jax: 0.10.0
libtpu: 0.0.40
codegen_flags: <defaults>
</compile_context>

<pallas_src>
import functools
import math

import jax
import jax.numpy as jnp
from jax.experimental import pallas as pl
from jax.experimental.pallas import tpu as pltpu

EPS = 1e-5


def res_block_kernel(x_ref, mask_ref, w1_ref, w2_ref,
                     g1_ref, be1_ref, g2_ref, be2_ref,
                     o_ref, apad_ref, m_ref, *, KH, KW, P, W):
    """Fused Res_block forward in channel-major flat layout.

    x_ref   : (C, NHW)                input; channels on sublanes, flat spatial on lanes
    mask_ref: (KH*KW, NHW)            0/1 validity mask per conv tap (zero padding)
    w*_ref  : (C, KH*KW*C)            conv weights, (Cout, kh, kw, Cin) flattened
    g*/be*  : (C, 1)                  BN affine parameters
    o_ref   : (C, NHW)                output (lane-dense minor dim)
    apad_ref: (C, NHW + 2*(P*W+P))    VMEM scratch: flat-padded activation
    m_ref   : (KH*KW*C, NHW)          VMEM scratch: im2col matrix
    """
    C, NHW = x_ref.shape
    pad = P * W + P  # max |flat shift| of any tap -> halo width on each side

    # Zero the flat-padded scratch once; both stages rewrite only the interior,
    # so the halo stays zero (this *is* the conv zero padding).
    apad_ref[...] = jnp.zeros_like(apad_ref)

    def conv_bn(act, w_ref, g_ref, be_ref):
        # Write activation into the padded scratch, gather the KH*KW shifted +
        # masked copies into the im2col scratch, then one MXU matmul.
        apad_ref[:, pad:pad + NHW] = act
        for kh in range(KH):
            for kw in range(KW):
                tap = kh * KW + kw
                off = (kh - P) * W + (kw - P)
                patch = apad_ref[:, pad + off:pad + off + NHW]       # (C, NHW)
                m_ref[tap * C:(tap + 1) * C, :] = patch * mask_ref[tap:tap + 1, :]
        y = jnp.dot(w_ref[...], m_ref[...], preferred_element_type=jnp.float32)
        # Training-mode BatchNorm: per-channel batch mean / biased variance.
        mean = jnp.mean(y, axis=1, keepdims=True)
        var = jnp.mean((y - mean) ** 2, axis=1, keepdims=True)
        return (y - mean) * jax.lax.rsqrt(var + EPS) * g_ref[...] + be_ref[...]

    x = x_ref[...]
    mid = jnp.maximum(conv_bn(x, w1_ref, g1_ref, be1_ref), 0.0)   # conv1->BN1->ReLU
    out = conv_bn(mid, w2_ref, g2_ref, be2_ref) + x               # conv2->BN2->+identity
    o_ref[...] = jnp.maximum(out, 0.0)                            # final ReLU


def res_block_forward(x_nchw, w1, b1, g1, be1, w2, b2, g2, be2, *, padding):
    """Forward pass of Res_block.

    b1/b2 are accepted for parity with the torch module but intentionally
    unused: training-mode BN's batch-mean subtraction cancels the conv bias
    exactly, so dropping it does not change the output.
    """
    del b1, b2
    N, C, H, W = x_nchw.shape
    KH, KW = w1.shape[2], w1.shape[3]
    P = padding
    NHW = N * H * W
    pad = P * W + P

    # ---- glue: layout conversion + constant tap-mask construction (tiny) ----
    x_flat = jnp.transpose(x_nchw, (1, 0, 2, 3)).reshape(C, NHW).astype(jnp.float32)

    def to_w2d(w_oihw):  # OIHW -> (O, KH, KW, I) -> (O, KH*KW*I); matches m_ref rows
        return jnp.transpose(w_oihw, (0, 2, 3, 1)).reshape(C, KH * KW * C).astype(jnp.float32)

    def to_col(v):
        return v.reshape(C, 1).astype(jnp.float32)

    idx = jnp.arange(NHW, dtype=jnp.int32)
    h_idx = (idx // W) % H
    w_idx = idx % W
    masks = []
    for kh in range(KH):
        for kw in range(KW):
            dh, dw = kh - P, kw - P
            valid = ((h_idx + dh >= 0) & (h_idx + dh < H) &
                     (w_idx + dw >= 0) & (w_idx + dw < W))
            masks.append(valid)
    mask = jnp.stack(masks).astype(jnp.float32)                   # (KH*KW, NHW)

    out2d = pl.pallas_call(
        functools.partial(res_block_kernel, KH=KH, KW=KW, P=P, W=W),
        out_shape=jax.ShapeDtypeStruct((C, NHW), jnp.float32),
        in_specs=[pl.BlockSpec(memory_space=pltpu.MemorySpace.VMEM)] * 8,
        out_specs=pl.BlockSpec(memory_space=pltpu.MemorySpace.VMEM),
        scratch_shapes=[pltpu.VMEM((C, NHW + 2 * pad), jnp.float32),   # flat-padded act
                        pltpu.VMEM((KH * KW * C, NHW), jnp.float32)],  # im2col matrix
    )(x_flat, mask, to_w2d(w1), to_w2d(w2),
      to_col(g1), to_col(be1), to_col(g2), to_col(be2))

    return jnp.transpose(out2d.reshape(C, N, H, W), (1, 0, 2, 3))   # -> NCHW


def res_block_ref(x_nchw, w1, b1, g1, be1, w2, b2, g2, be2, *, padding):
    """Pure-JAX reference (no Pallas), matching the PyTorch module (with bias)."""
    x = jnp.transpose(x_nchw, (0, 2, 3, 1)).astype(jnp.float32)
    P = padding

    def conv(xin, w_oihw, b):
        w = jnp.transpose(w_oihw, (2, 3, 1, 0))
        y = jax.lax.conv_general_dilated(xin, w, (1, 1), [(P, P), (P, P)],
                                         dimension_numbers=("NHWC", "HWIO", "NHWC"))
        return y + b

    def bn(y, g, be):
        m = y.mean(axis=(0, 1, 2))
        v = ((y - m) ** 2).mean(axis=(0, 1, 2))
        return (y - m) * jax.lax.rsqrt(v + EPS) * g + be

    out = jax.nn.relu(bn(conv(x, w1, b1), g1, be1))
    out = jax.nn.relu(bn(conv(out, w2, b2), g2, be2) + x)
    return jnp.transpose(out, (0, 3, 1, 2))


if __name__ == "__main__":
    # Small shapes consistent with Res_block(inplanes=4, kernel_size=3, padding=1)
    N, C, H, W = 2, 4, 16, 16
    K, P = 3, 1

    key = jax.random.PRNGKey(0)
    ks = jax.random.split(key, 5)
    x = jax.random.normal(ks[0], (N, C, H, W), jnp.float32)

    # Deterministic parameter init (torch-style uniform(-1/sqrt(fan_in), ...)).
    fan_in = C * K * K
    bw = 1.0 / math.sqrt(fan_in)
    w1 = jax.random.uniform(ks[1], (C, C, K, K), jnp.float32, -bw, bw)   # OIHW
    b1 = jax.random.uniform(ks[2], (C,), jnp.float32, -bw, bw)
    w2 = jax.random.uniform(ks[3], (C, C, K, K), jnp.float32, -bw, bw)
    b2 = jax.random.uniform(ks[4], (C,), jnp.float32, -bw, bw)
    g1 = jnp.ones((C,), jnp.float32)
    be1 = jnp.zeros((C,), jnp.float32)
    g2 = jnp.ones((C,), jnp.float32)
    be2 = jnp.zeros((C,), jnp.float32)

    out = res_block_forward(x, w1, b1, g1, be1, w2, b2, g2, be2, padding=P)
    out = jax.block_until_ready(out)

    ref = res_block_ref(x, w1, b1, g1, be1, w2, b2, g2, be2, padding=P)
    err = float(jnp.max(jnp.abs(out - ref)))
    assert out.shape == (N, C, H, W)
    assert jnp.allclose(out, ref, atol=5e-4, rtol=5e-4), f"max abs err {err}"

    print("KERNEL_OK")
</pallas_src>

<mosaic_0001>
module attributes {stable_mosaic.version = 11 : i64} {
  func.func @res_block_kernel(%arg0: memref<4x512xf32, #tpu.memory_space<vmem>>, %arg1: memref<9x512xf32, #tpu.memory_space<vmem>>, %arg2: memref<4x36xf32, #tpu.memory_space<vmem>>, %arg3: memref<4x36xf32, #tpu.memory_space<vmem>>, %arg4: memref<4x1xf32, #tpu.memory_space<vmem>>, %arg5: memref<4x1xf32, #tpu.memory_space<vmem>>, %arg6: memref<4x1xf32, #tpu.memory_space<vmem>>, %arg7: memref<4x1xf32, #tpu.memory_space<vmem>>, %arg8: memref<4x512xf32, #tpu.memory_space<vmem>>, %arg9: memref<4x546xf32, #tpu.memory_space<vmem>>, %arg10: memref<36x512xf32, #tpu.memory_space<vmem>>) attributes {dimension_semantics = [], scalar_prefetch = 0 : i64, scratch_operands = 2 : i64, tpu.core_type = #tpu.core_type<tc>} {
    %cst = arith.constant 0.000000e+00 : f32
    %0 = vector.broadcast %cst : f32 to vector<4x546xf32>
    %c0 = arith.constant 0 : index
    %c0_0 = arith.constant 0 : index
    %1 = vector.load %arg9[%c0, %c0_0] : memref<4x546xf32, #tpu.memory_space<vmem>>, vector<4x546xf32>
    tpu.vector_store %arg9[%c0, %c0_0], %0 {strides = array<i32>} : memref<4x546xf32, #tpu.memory_space<vmem>>, vector<4x546xf32>,
    %c0_1 = arith.constant 0 : index
    %c0_2 = arith.constant 0 : index
    %2 = vector.load %arg0[%c0_1, %c0_2] : memref<4x512xf32, #tpu.memory_space<vmem>>, vector<4x512xf32>
    %c0_3 = arith.constant 0 : index
    %c17 = arith.constant 17 : index
    %3 = vector.load %arg9[%c0_3, %c17] : memref<4x546xf32, #tpu.memory_space<vmem>>, vector<4x512xf32>
    tpu.vector_store %arg9[%c0_3, %c17], %2 {strides = array<i32>} : memref<4x546xf32, #tpu.memory_space<vmem>>, vector<4x512xf32>,
    %c0_4 = arith.constant 0 : index
    %c0_5 = arith.constant 0 : index
    %4 = vector.load %arg9[%c0_4, %c0_5] : memref<4x546xf32, #tpu.memory_space<vmem>>, vector<4x512xf32>
    %c0_6 = arith.constant 0 : index
    %c0_7 = arith.constant 0 : index
    %5 = vector.load %arg1[%c0_6, %c0_7] : memref<9x512xf32, #tpu.memory_space<vmem>>, vector<1x512xf32>
    %6 = vector.broadcast %5 : vector<1x512xf32> to vector<4x512xf32>
    %7 = arith.mulf %4, %6 : vector<4x512xf32>
    %c0_8 = arith.constant 0 : index
    %c0_9 = arith.constant 0 : index
    %8 = vector.load %arg10[%c0_8, %c0_9] : memref<36x512xf32, #tpu.memory_space<vmem>>, vector<4x512xf32>
    tpu.vector_store %arg10[%c0_8, %c0_9], %7 {strides = array<i32>} : memref<36x512xf32, #tpu.memory_space<vmem>>, vector<4x512xf32>,
    %c0_10 = arith.constant 0 : index
    %c1 = arith.constant 1 : index
    %9 = vector.load %arg9[%c0_10, %c1] : memref<4x546xf32, #tpu.memory_space<vmem>>, vector<4x512xf32>
    %c1_11 = arith.constant 1 : index
    %c0_12 = arith.constant 0 : index
    %10 = vector.load %arg1[%c1_11, %c0_12] : memref<9x512xf32, #tpu.memory_space<vmem>>, vector<1x512xf32>
    %11 = vector.broadcast %10 : vector<1x512xf32> to vector<4x512xf32>
    %12 = arith.mulf %9, %11 : vector<4x512xf32>
    %c4 = arith.constant 4 : index
    %c0_13 = arith.constant 0 : index
    %13 = vector.load %arg10[%c4, %c0_13] : memref<36x512xf32, #tpu.memory_space<vmem>>, vector<4x512xf32>
    tpu.vector_store %arg10[%c4, %c0_13], %12 {strides = array<i32>} : memref<36x512xf32, #tpu.memory_space<vmem>>, vector<4x512xf32>,
    %c0_14 = arith.constant 0 : index
    %c2 = arith.constant 2 : index
    %14 = vector.load %arg9[%c0_14, %c2] : memref<4x546xf32, #tpu.memory_space<vmem>>, vector<4x512xf32>
    %c2_15 = arith.constant 2 : index
    %c0_16 = arith.constant 0 : index
    %15 = vector.load %arg1[%c2_15, %c0_16] : memref<9x512xf32, #tpu.memory_space<vmem>>, vector<1x512xf32>
    %16 = vector.broadcast %15 : vector<1x512xf32> to vector<4x512xf32>
    %17 = arith.mulf %14, %16 : vector<4x512xf32>
    %c8 = arith.constant 8 : index
    %c0_17 = arith.constant 0 : index
    %18 = vector.load %arg10[%c8, %c0_17] : memref<36x512xf32, #tpu.memory_space<vmem>>, vector<4x512xf32>
    tpu.vector_store %arg10[%c8, %c0_17], %17 {strides = array<i32>} : memref<36x512xf32, #tpu.memory_space<vmem>>, vector<4x512xf32>,
    %c0_18 = arith.constant 0 : index
    %c16 = arith.constant 16 : index
    %19 = vector.load %arg9[%c0_18, %c16] : memref<4x546xf32, #tpu.memory_space<vmem>>, vector<4x512xf32>
    %c3 = arith.constant 3 : index
    %c0_19 = arith.constant 0 : index
    %20 = vector.load %arg1[%c3, %c0_19] : memref<9x512xf32, #tpu.memory_space<vmem>>, vector<1x512xf32>
    %21 = vector.broadcast %20 : vector<1x512xf32> to vector<4x512xf32>
    %22 = arith.mulf %19, %21 : vector<4x512xf32>
    %c12 = arith.constant 12 : index
    %c0_20 = arith.constant 0 : index
    %23 = vector.load %arg10[%c12, %c0_20] : memref<36x512xf32, #tpu.memory_space<vmem>>, vector<4x512xf32>
    tpu.vector_store %arg10[%c12, %c0_20], %22 {strides = array<i32>} : memref<36x512xf32, #tpu.memory_space<vmem>>, vector<4x512xf32>,
    %c0_21 = arith.constant 0 : index
    %c17_22 = arith.constant 17 : index
    %24 = vector.load %arg9[%c0_21, %c17_22] : memref<4x546xf32, #tpu.memory_space<vmem>>, vector<4x512xf32>
    %c4_23 = arith.constant 4 : index
    %c0_24 = arith.constant 0 : index
    %25 = vector.load %arg1[%c4_23, %c0_24] : memref<9x512xf32, #tpu.memory_space<vmem>>, vector<1x512xf32>
    %26 = vector.broadcast %25 : vector<1x512xf32> to vector<4x512xf32>
    %27 = arith.mulf %24, %26 : vector<4x512xf32>
    %c16_25 = arith.constant 16 : index
    %c0_26 = arith.constant 0 : index
    %28 = vector.load %arg10[%c16_25, %c0_26] : memref<36x512xf32, #tpu.memory_space<vmem>>, vector<4x512xf32>
    tpu.vector_store %arg10[%c16_25, %c0_26], %27 {strides = array<i32>} : memref<36x512xf32, #tpu.memory_space<vmem>>, vector<4x512xf32>,
    %c0_27 = arith.constant 0 : index
    %c18 = arith.constant 18 : index
    %29 = vector.load %arg9[%c0_27, %c18] : memref<4x546xf32, #tpu.memory_space<vmem>>, vector<4x512xf32>
    %c5 = arith.constant 5 : index
    %c0_28 = arith.constant 0 : index
    %30 = vector.load %arg1[%c5, %c0_28] : memref<9x512xf32, #tpu.memory_space<vmem>>, vector<1x512xf32>
    %31 = vector.broadcast %30 : vector<1x512xf32> to vector<4x512xf32>
    %32 = arith.mulf %29, %31 : vector<4x512xf32>
    %c20 = arith.constant 20 : index
    %c0_29 = arith.constant 0 : index
    %33 = vector.load %arg10[%c20, %c0_29] : memref<36x512xf32, #tpu.memory_space<vmem>>, vector<4x512xf32>
    tpu.vector_store %arg10[%c20, %c0_29], %32 {strides = array<i32>} : memref<36x512xf32, #tpu.memory_space<vmem>>, vector<4x512xf32>,
    %c0_30 = arith.constant 0 : index
    %c32 = arith.constant 32 : index
    %34 = vector.load %arg9[%c0_30, %c32] : memref<4x546xf32, #tpu.memory_space<vmem>>, vector<4x512xf32>
    %c6 = arith.constant 6 : index
    %c0_31 = arith.constant 0 : index
    %35 = vector.load %arg1[%c6, %c0_31] : memref<9x512xf32, #tpu.memory_space<vmem>>, vector<1x512xf32>
    %36 = vector.broadcast %35 : vector<1x512xf32> to vector<4x512xf32>
    %37 = arith.mulf %34, %36 : vector<4x512xf32>
    %c24 = arith.constant 24 : index
    %c0_32 = arith.constant 0 : index
    %38 = vector.load %arg10[%c24, %c0_32] : memref<36x512xf32, #tpu.memory_space<vmem>>, vector<4x512xf32>
    tpu.vector_store %arg10[%c24, %c0_32], %37 {strides = array<i32>} : memref<36x512xf32, #tpu.memory_space<vmem>>, vector<4x512xf32>,
    %c0_33 = arith.constant 0 : index
    %c33 = arith.constant 33 : index
    %39 = vector.load %arg9[%c0_33, %c33] : memref<4x546xf32, #tpu.memory_space<vmem>>, vector<4x512xf32>
    %c7 = arith.constant 7 : index
    %c0_34 = arith.constant 0 : index
    %40 = vector.load %arg1[%c7, %c0_34] : memref<9x512xf32, #tpu.memory_space<vmem>>, vector<1x512xf32>
    %41 = vector.broadcast %40 : vector<1x512xf32> to vector<4x512xf32>
    %42 = arith.mulf %39, %41 : vector<4x512xf32>
    %c28 = arith.constant 28 : index
    %c0_35 = arith.constant 0 : index
    %43 = vector.load %arg10[%c28, %c0_35] : memref<36x512xf32, #tpu.memory_space<vmem>>, vector<4x512xf32>
    tpu.vector_store %arg10[%c28, %c0_35], %42 {strides = array<i32>} : memref<36x512xf32, #tpu.memory_space<vmem>>, vector<4x512xf32>,
    %c0_36 = arith.constant 0 : index
    %c34 = arith.constant 34 : index
    %44 = vector.load %arg9[%c0_36, %c34] : memref<4x546xf32, #tpu.memory_space<vmem>>, vector<4x512xf32>
    %c8_37 = arith.constant 8 : index
    %c0_38 = arith.constant 0 : index
    %45 = vector.load %arg1[%c8_37, %c0_38] : memref<9x512xf32, #tpu.memory_space<vmem>>, vector<1x512xf32>
    %46 = vector.broadcast %45 : vector<1x512xf32> to vector<4x512xf32>
    %47 = arith.mulf %44, %46 : vector<4x512xf32>
    %c32_39 = arith.constant 32 : index
    %c0_40 = arith.constant 0 : index
    %48 = vector.load %arg10[%c32_39, %c0_40] : memref<36x512xf32, #tpu.memory_space<vmem>>, vector<4x512xf32>
    tpu.vector_store %arg10[%c32_39, %c0_40], %47 {strides = array<i32>} : memref<36x512xf32, #tpu.memory_space<vmem>>, vector<4x512xf32>,
    %c0_41 = arith.constant 0 : index
    %c0_42 = arith.constant 0 : index
    %49 = vector.load %arg2[%c0_41, %c0_42] : memref<4x36xf32, #tpu.memory_space<vmem>>, vector<4x36xf32>
    %c0_43 = arith.constant 0 : index
    %c0_44 = arith.constant 0 : index
    %50 = vector.load %arg10[%c0_43, %c0_44] : memref<36x512xf32, #tpu.memory_space<vmem>>, vector<36x512xf32>
    %cst_45 = arith.constant dense<0.000000e+00> : vector<4x512xf32>
    %51 = tpu.matmul %49, %50, %cst_45 {dimension_numbers = #tpu.dot_dimension_numbers<[1], [0], [0], [1], [0, 0, 1, 1], [], []>} : vector<4x36xf32>, vector<36x512xf32>, vector<4x512xf32> -> vector<4x512xf32>
    %cst_46 = arith.constant dense<0.000000e+00> : vector<4xf32>
    %52 = vector.multi_reduction <add>, %51, %cst_46 [1] : vector<4x512xf32> to vector<4xf32>
    %53 = vector.shape_cast %52 : vector<4xf32> to vector<4x1xf32>
    %cst_47 = arith.constant 5.120000e+02 : f32
    %54 = vector.broadcast %cst_47 : f32 to vector<4x1xf32>
    %55 = arith.divf %53, %54 : vector<4x1xf32>
    %56 = vector.broadcast %55 : vector<4x1xf32> to vector<4x512xf32>
    %57 = arith.subf %51, %56 : vector<4x512xf32>
    %58 = arith.mulf %57, %57 : vector<4x512xf32>
    %cst_48 = arith.constant dense<0.000000e+00> : vector<4xf32>
    %59 = vector.multi_reduction <add>, %58, %cst_48 [1] : vector<4x512xf32> to vector<4xf32>
    %60 = vector.shape_cast %59 : vector<4xf32> to vector<4x1xf32>
    %cst_49 = arith.constant 5.120000e+02 : f32
    %61 = vector.broadcast %cst_49 : f32 to vector<4x1xf32>
    %62 = arith.divf %60, %61 : vector<4x1xf32>
    %63 = vector.broadcast %55 : vector<4x1xf32> to vector<4x512xf32>
    %64 = arith.subf %51, %63 : vector<4x512xf32>
    %cst_50 = arith.constant 9.99999974E-6 : f32
    %65 = vector.broadcast %cst_50 : f32 to vector<4x1xf32>
    %66 = arith.addf %62, %65 : vector<4x1xf32>
    %67 = math.rsqrt %66 : vector<4x1xf32>
    %68 = vector.broadcast %67 : vector<4x1xf32> to vector<4x512xf32>
    %69 = arith.mulf %64, %68 : vector<4x512xf32>
    %c0_51 = arith.constant 0 : index
    %c0_52 = arith.constant 0 : index
    %70 = vector.load %arg4[%c0_51, %c0_52] : memref<4x1xf32, #tpu.memory_space<vmem>>, vector<4x1xf32>
    %71 = vector.broadcast %70 : vector<4x1xf32> to vector<4x512xf32>
    %72 = arith.mulf %69, %71 : vector<4x512xf32>
    %c0_53 = arith.constant 0 : index
    %c0_54 = arith.constant 0 : index
    %73 = vector.load %arg5[%c0_53, %c0_54] : memref<4x1xf32, #tpu.memory_space<vmem>>, vector<4x1xf32>
    %74 = vector.broadcast %73 : vector<4x1xf32> to vector<4x512xf32>
    %75 = arith.addf %72, %74 : vector<4x512xf32>
    %cst_55 = arith.constant 0.000000e+00 : f32
    %76 = vector.broadcast %cst_55 : f32 to vector<4x512xf32>
    %77 = arith.maximumf %75, %76 : vector<4x512xf32>
    %c0_56 = arith.constant 0 : index
    %c17_57 = arith.constant 17 : index
    %78 = vector.load %arg9[%c0_56, %c17_57] : memref<4x546xf32, #tpu.memory_space<vmem>>, vector<4x512xf32>
    tpu.vector_store %arg9[%c0_56, %c17_57], %77 {strides = array<i32>} : memref<4x546xf32, #tpu.memory_space<vmem>>, vector<4x512xf32>,
    %c0_58 = arith.constant 0 : index
    %c0_59 = arith.constant 0 : index
    %79 = vector.load %arg9[%c0_58, %c0_59] : memref<4x546xf32, #tpu.memory_space<vmem>>, vector<4x512xf32>
    %c0_60 = arith.constant 0 : index
    %c0_61 = arith.constant 0 : index
    %80 = vector.load %arg1[%c0_60, %c0_61] : memref<9x512xf32, #tpu.memory_space<vmem>>, vector<1x512xf32>
    %81 = vector.broadcast %80 : vector<1x512xf32> to vector<4x512xf32>
    %82 = arith.mulf %79, %81 : vector<4x512xf32>
    %c0_62 = arith.constant 0 : index
    %c0_63 = arith.constant 0 : index
    %83 = vector.load %arg10[%c0_62, %c0_63] : memref<36x512xf32, #tpu.memory_space<vmem>>, vector<4x512xf32>
    tpu.vector_store %arg10[%c0_62, %c0_63], %82 {strides = array<i32>} : memref<36x512xf32, #tpu.memory_space<vmem>>, vector<4x512xf32>,
    %c0_64 = arith.constant 0 : index
    %c1_65 = arith.constant 1 : index
    %84 = vector.load %arg9[%c0_64, %c1_65] : memref<4x546xf32, #tpu.memory_space<vmem>>, vector<4x512xf32>
    %c1_66 = arith.constant 1 : index
    %c0_67 = arith.constant 0 : index
    %85 = vector.load %arg1[%c1_66, %c0_67] : memref<9x512xf32, #tpu.memory_space<vmem>>, vector<1x512xf32>
    %86 = vector.broadcast %85 : vector<1x512xf32> to vector<4x512xf32>
    %87 = arith.mulf %84, %86 : vector<4x512xf32>
    %c4_68 = arith.constant 4 : index
    %c0_69 = arith.constant 0 : index
    %88 = vector.load %arg10[%c4_68, %c0_69] : memref<36x512xf32, #tpu.memory_space<vmem>>, vector<4x512xf32>
    tpu.vector_store %arg10[%c4_68, %c0_69], %87 {strides = array<i32>} : memref<36x512xf32, #tpu.memory_space<vmem>>, vector<4x512xf32>,
    %c0_70 = arith.constant 0 : index
    %c2_71 = arith.constant 2 : index
    %89 = vector.load %arg9[%c0_70, %c2_71] : memref<4x546xf32, #tpu.memory_space<vmem>>, vector<4x512xf32>
    %c2_72 = arith.constant 2 : index
    %c0_73 = arith.constant 0 : index
    %90 = vector.load %arg1[%c2_72, %c0_73] : memref<9x512xf32, #tpu.memory_space<vmem>>, vector<1x512xf32>
    %91 = vector.broadcast %90 : vector<1x512xf32> to vector<4x512xf32>
    %92 = arith.mulf %89, %91 : vector<4x512xf32>
    %c8_74 = arith.constant 8 : index
    %c0_75 = arith.constant 0 : index
    %93 = vector.load %arg10[%c8_74, %c0_75] : memref<36x512xf32, #tpu.memory_space<vmem>>, vector<4x512xf32>
    tpu.vector_store %arg10[%c8_74, %c0_75], %92 {strides = array<i32>} : memref<36x512xf32, #tpu.memory_space<vmem>>, vector<4x512xf32>,
    %c0_76 = arith.constant 0 : index
    %c16_77 = arith.constant 16 : index
    %94 = vector.load %arg9[%c0_76, %c16_77] : memref<4x546xf32, #tpu.memory_space<vmem>>, vector<4x512xf32>
    %c3_78 = arith.constant 3 : index
    %c0_79 = arith.constant 0 : index
    %95 = vector.load %arg1[%c3_78, %c0_79] : memref<9x512xf32, #tpu.memory_space<vmem>>, vector<1x512xf32>
    %96 = vector.broadcast %95 : vector<1x512xf32> to vector<4x512xf32>
    %97 = arith.mulf %94, %96 : vector<4x512xf32>
    %c12_80 = arith.constant 12 : index
    %c0_81 = arith.constant 0 : index
    %98 = vector.load %arg10[%c12_80, %c0_81] : memref<36x512xf32, #tpu.memory_space<vmem>>, vector<4x512xf32>
    tpu.vector_store %arg10[%c12_80, %c0_81], %97 {strides = array<i32>} : memref<36x512xf32, #tpu.memory_space<vmem>>, vector<4x512xf32>,
    %c0_82 = arith.constant 0 : index
    %c17_83 = arith.constant 17 : index
    %99 = vector.load %arg9[%c0_82, %c17_83] : memref<4x546xf32, #tpu.memory_space<vmem>>, vector<4x512xf32>
    %c4_84 = arith.constant 4 : index
    %c0_85 = arith.constant 0 : index
    %100 = vector.load %arg1[%c4_84, %c0_85] : memref<9x512xf32, #tpu.memory_space<vmem>>, vector<1x512xf32>
    %101 = vector.broadcast %100 : vector<1x512xf32> to vector<4x512xf32>
    %102 = arith.mulf %99, %101 : vector<4x512xf32>
    %c16_86 = arith.constant 16 : index
    %c0_87 = arith.constant 0 : index
    %103 = vector.load %arg10[%c16_86, %c0_87] : memref<36x512xf32, #tpu.memory_space<vmem>>, vector<4x512xf32>
    tpu.vector_store %arg10[%c16_86, %c0_87], %102 {strides = array<i32>} : memref<36x512xf32, #tpu.memory_space<vmem>>, vector<4x512xf32>,
    %c0_88 = arith.constant 0 : index
    %c18_89 = arith.constant 18 : index
    %104 = vector.load %arg9[%c0_88, %c18_89] : memref<4x546xf32, #tpu.memory_space<vmem>>, vector<4x512xf32>
    %c5_90 = arith.constant 5 : index
    %c0_91 = arith.constant 0 : index
    %105 = vector.load %arg1[%c5_90, %c0_91] : memref<9x512xf32, #tpu.memory_space<vmem>>, vector<1x512xf32>
    %106 = vector.broadcast %105 : vector<1x512xf32> to vector<4x512xf32>
    %107 = arith.mulf %104, %106 : vector<4x512xf32>
    %c20_92 = arith.constant 20 : index
    %c0_93 = arith.constant 0 : index
    %108 = vector.load %arg10[%c20_92, %c0_93] : memref<36x512xf32, #tpu.memory_space<vmem>>, vector<4x512xf32>
    tpu.vector_store %arg10[%c20_92, %c0_93], %107 {strides = array<i32>} : memref<36x512xf32, #tpu.memory_space<vmem>>, vector<4x512xf32>,
    %c0_94 = arith.constant 0 : index
    %c32_95 = arith.constant 32 : index
    %109 = vector.load %arg9[%c0_94, %c32_95] : memref<4x546xf32, #tpu.memory_space<vmem>>, vector<4x512xf32>
    %c6_96 = arith.constant 6 : index
    %c0_97 = arith.constant 0 : index
    %110 = vector.load %arg1[%c6_96, %c0_97] : memref<9x512xf32, #tpu.memory_space<vmem>>, vector<1x512xf32>
    %111 = vector.broadcast %110 : vector<1x512xf32> to vector<4x512xf32>
    %112 = arith.mulf %109, %111 : vector<4x512xf32>
    %c24_98 = arith.constant 24 : index
    %c0_99 = arith.constant 0 : index
    %113 = vector.load %arg10[%c24_98, %c0_99] : memref<36x512xf32, #tpu.memory_space<vmem>>, vector<4x512xf32>
    tpu.vector_store %arg10[%c24_98, %c0_99], %112 {strides = array<i32>} : memref<36x512xf32, #tpu.memory_space<vmem>>, vector<4x512xf32>,
    %c0_100 = arith.constant 0 : index
    %c33_101 = arith.constant 33 : index
    %114 = vector.load %arg9[%c0_100, %c33_101] : memref<4x546xf32, #tpu.memory_space<vmem>>, vector<4x512xf32>
    %c7_102 = arith.constant 7 : index
    %c0_103 = arith.constant 0 : index
    %115 = vector.load %arg1[%c7_102, %c0_103] : memref<9x512xf32, #tpu.memory_space<vmem>>, vector<1x512xf32>
    %116 = vector.broadcast %115 : vector<1x512xf32> to vector<4x512xf32>
    %117 = arith.mulf %114, %116 : vector<4x512xf32>
    %c28_104 = arith.constant 28 : index
    %c0_105 = arith.constant 0 : index
    %118 = vector.load %arg10[%c28_104, %c0_105] : memref<36x512xf32, #tpu.memory_space<vmem>>, vector<4x512xf32>
    tpu.vector_store %arg10[%c28_104, %c0_105], %117 {strides = array<i32>} : memref<36x512xf32, #tpu.memory_space<vmem>>, vector<4x512xf32>,
    %c0_106 = arith.constant 0 : index
    %c34_107 = arith.constant 34 : index
    %119 = vector.load %arg9[%c0_106, %c34_107] : memref<4x546xf32, #tpu.memory_space<vmem>>, vector<4x512xf32>
    %c8_108 = arith.constant 8 : index
    %c0_109 = arith.constant 0 : index
    %120 = vector.load %arg1[%c8_108, %c0_109] : memref<9x512xf32, #tpu.memory_space<vmem>>, vector<1x512xf32>
    %121 = vector.broadcast %120 : vector<1x512xf32> to vector<4x512xf32>
    %122 = arith.mulf %119, %121 : vector<4x512xf32>
    %c32_110 = arith.constant 32 : index
    %c0_111 = arith.constant 0 : index
    %123 = vector.load %arg10[%c32_110, %c0_111] : memref<36x512xf32, #tpu.memory_space<vmem>>, vector<4x512xf32>
    tpu.vector_store %arg10[%c32_110, %c0_111], %122 {strides = array<i32>} : memref<36x512xf32, #tpu.memory_space<vmem>>, vector<4x512xf32>,
    %c0_112 = arith.constant 0 : index
    %c0_113 = arith.constant 0 : index
    %124 = vector.load %arg3[%c0_112, %c0_113] : memref<4x36xf32, #tpu.memory_space<vmem>>, vector<4x36xf32>
    %c0_114 = arith.constant 0 : index
    %c0_115 = arith.constant 0 : index
    %125 = vector.load %arg10[%c0_114, %c0_115] : memref<36x512xf32, #tpu.memory_space<vmem>>, vector<36x512xf32>
    %cst_116 = arith.constant dense<0.000000e+00> : vector<4x512xf32>
    %126 = tpu.matmul %124, %125, %cst_116 {dimension_numbers = #tpu.dot_dimension_numbers<[1], [0], [0], [1], [0, 0, 1, 1], [], []>} : vector<4x36xf32>, vector<36x512xf32>, vector<4x512xf32> -> vector<4x512xf32>
    %cst_117 = arith.constant dense<0.000000e+00> : vector<4xf32>
    %127 = vector.multi_reduction <add>, %126, %cst_117 [1] : vector<4x512xf32> to vector<4xf32>
    %128 = vector.shape_cast %127 : vector<4xf32> to vector<4x1xf32>
    %cst_118 = arith.constant 5.120000e+02 : f32
    %129 = vector.broadcast %cst_118 : f32 to vector<4x1xf32>
    %130 = arith.divf %128, %129 : vector<4x1xf32>
    %131 = vector.broadcast %130 : vector<4x1xf32> to vector<4x512xf32>
    %132 = arith.subf %126, %131 : vector<4x512xf32>
    %133 = arith.mulf %132, %132 : vector<4x512xf32>
    %cst_119 = arith.constant dense<0.000000e+00> : vector<4xf32>
    %134 = vector.multi_reduction <add>, %133, %cst_119 [1] : vector<4x512xf32> to vector<4xf32>
    %135 = vector.shape_cast %134 : vector<4xf32> to vector<4x1xf32>
    %cst_120 = arith.constant 5.120000e+02 : f32
    %136 = vector.broadcast %cst_120 : f32 to vector<4x1xf32>
    %137 = arith.divf %135, %136 : vector<4x1xf32>
    %138 = vector.broadcast %130 : vector<4x1xf32> to vector<4x512xf32>
    %139 = arith.subf %126, %138 : vector<4x512xf32>
    %cst_121 = arith.constant 9.99999974E-6 : f32
    %140 = vector.broadcast %cst_121 : f32 to vector<4x1xf32>
    %141 = arith.addf %137, %140 : vector<4x1xf32>
    %142 = math.rsqrt %141 : vector<4x1xf32>
    %143 = vector.broadcast %142 : vector<4x1xf32> to vector<4x512xf32>
    %144 = arith.mulf %139, %143 : vector<4x512xf32>
    %c0_122 = arith.constant 0 : index
    %c0_123 = arith.constant 0 : index
    %145 = vector.load %arg6[%c0_122, %c0_123] : memref<4x1xf32, #tpu.memory_space<vmem>>, vector<4x1xf32>
    %146 = vector.broadcast %145 : vector<4x1xf32> to vector<4x512xf32>
    %147 = arith.mulf %144, %146 : vector<4x512xf32>
    %c0_124 = arith.constant 0 : index
    %c0_125 = arith.constant 0 : index
    %148 = vector.load %arg7[%c0_124, %c0_125] : memref<4x1xf32, #tpu.memory_space<vmem>>, vector<4x1xf32>
    %149 = vector.broadcast %148 : vector<4x1xf32> to vector<4x512xf32>
    %150 = arith.addf %147, %149 : vector<4x512xf32>
    %151 = arith.addf %150, %2 : vector<4x512xf32>
    %cst_126 = arith.constant 0.000000e+00 : f32
    %152 = vector.broadcast %cst_126 : f32 to vector<4x512xf32>
    %153 = arith.maximumf %151, %152 : vector<4x512xf32>
    %c0_127 = arith.constant 0 : index
    %c0_128 = arith.constant 0 : index
    %154 = vector.load %arg8[%c0_127, %c0_128] : memref<4x512xf32, #tpu.memory_space<vmem>>, vector<4x512xf32>
    tpu.vector_store %arg8[%c0_127, %c0_128], %153 {strides = array<i32>} : memref<4x512xf32, #tpu.memory_space<vmem>>, vector<4x512xf32>,
    return
  }
}

</mosaic_0001>

<llo_original>
// kernel: tpu_custom_call.1
$region0: #{tpu_custom_call.1}
  #allocation0 [shape = 'u32[]', space=smem, size = 0x4, offset = 0x4, fixed_abs, tag = 'smem constant byte address 0x4 - core index']
  #allocation1 [shape = 'u32[72,128]{1,0:T(1,128)}', space=vmem, size = 0x9000, scoped, tag = 'internal scratch']
  #allocation2 [shape = 'f32[4,546]{1,0:T(4,128)}', space=vmem, size = 0x2800, scoped, tag = 'scratch operand']
  #allocation3 [shape = 'f32[36,512]{1,0:T(8,128)}', space=vmem, size = 0x14000, scoped, tag = 'scratch operand']
  %s0 = inlined_call_operand.hbm [shape: f32[4,512], index: 0, kind: input, shape index: {}]
  %s1 = inlined_call_operand.hbm [shape: f32[9,512], index: 1, kind: input, shape index: {}]
  %s2 = inlined_call_operand.vmem [shape: f32[4,36], index: 2, kind: input, shape index: {}]
  %s3 = inlined_call_operand.vmem [shape: f32[4,36], index: 3, kind: input, shape index: {}]
  %s4 = inlined_call_operand.vmem [shape: f32[4,1], index: 4, kind: input, shape index: {}]
  %s5 = inlined_call_operand.vmem [shape: f32[4,1], index: 5, kind: input, shape index: {}]
  %s6 = inlined_call_operand.vmem [shape: f32[4,1], index: 6, kind: input, shape index: {}]
  %s7 = inlined_call_operand.vmem [shape: f32[4,1], index: 7, kind: input, shape index: {}]
  %s8 = inlined_call_operand.hbm [shape: f32[4,512], index: 8, kind: output, shape index: {}]
  %s9 = sld [smem:[#allocation0]]
  $region50: #{tpu_custom_call.1} parent=0
    _
  %s11 = ssub.s32 1, %s9
  %s12 = scalar_select 0, %s11, %s9
  $region1: #{tpu_custom_call.1} parent=0
    #allocation4 [shape = 'u8[8192]{0}', space=vmem, size = 0x2000, scoped, tag = 'input window, operand 0, single buffered']
    #allocation5 [shape = 's32[1]{0}', space=sflag, size = 0x4, scoped, tag = 'scoped memory for tpu_custom_call.1']
    #allocation6 [shape = 's32[1]{0}', space=sflag, size = 0x4, scoped, tag = 'scoped memory for tpu_custom_call.1']
    #allocation7 [shape = 'u8[32768]{0}', space=vmem, size = 0x8000, scoped, tag = 'input window, operand 1, single buffered']
    #allocation8 [shape = 's32[1]{0}', space=sflag, size = 0x4, scoped, tag = 'scoped memory for tpu_custom_call.1']
    #allocation9 [shape = 'u8[8192]{0}', space=vmem, size = 0x2000, scoped, tag = 'output window, operand 0, single buffered']
    %13 = vsyncpa [#allocation5], 0
    %14 = vsyncpa [#allocation8], 0
    %15 = vsyncpa [#allocation6], 0
    // Predicated region
    $region2: #{tpu_custom_call.1} parent=1 // pred_check
      _
    $region3: #{tpu_custom_call.1} parent=1 // pred_check_branch
      %17 = sbr.rel (0) target = $region5
    $region4: #{tpu_custom_call.1} parent=1 // pred_region
      %19 = vsyncadd [#allocation5], 0
      %s21 = sshll.u32 %s0, 4
      %s22 = int_to_ptr.hbm [resolvable:$true] %s21
      %s23 = sshll.u32 [#allocation4], 4
      %s24 = int_to_ptr.vmem [resolvable:$true] %s23
      %26 = dma.hbm_to_vmem [thread:$0]  %s22, 256, %s24, [#allocation5]
    $region5: #{tpu_custom_call.1} parent=1 // pred_fallthru
      _
    // Predicated region
    $region6: #{tpu_custom_call.1} parent=1 // pred_check
      _
    $region7: #{tpu_custom_call.1} parent=1 // pred_check_branch
      %28 = sbr.rel (0) target = $region9
    $region8: #{tpu_custom_call.1} parent=1 // pred_region
      %30 = vsyncadd [#allocation8], 0
      %s31 = sshll.u32 %s1, 4
      %s32 = int_to_ptr.hbm [resolvable:$true] %s31
      %s33 = sshll.u32 [#allocation7], 4
      %s34 = int_to_ptr.vmem [resolvable:$true] %s33
      %39 = dma.hbm_to_vmem [thread:$0]  %s32, 1024, %s34, [#allocation8], 512, 512, 32
    $region9: #{tpu_custom_call.1} parent=1 // pred_fallthru
      _
    // Predicated region
    $region10: #{tpu_custom_call.1} parent=1 // pred_check
      _
    $region11: #{tpu_custom_call.1} parent=1 // pred_check_branch
      %41 = sbr.rel (0) target = $region13
    $region12: #{tpu_custom_call.1} parent=1 // pred_region
      _
    $region13: #{tpu_custom_call.1} parent=1 // pred_fallthru
      _
    // Predicated region
    $region14: #{tpu_custom_call.1} parent=1 // pred_check
      _
    $region15: #{tpu_custom_call.1} parent=1 // pred_check_branch
      %43 = sbr.rel (0) target = $region17
    $region16: #{tpu_custom_call.1} parent=1 // pred_region
      _
    $region17: #{tpu_custom_call.1} parent=1 // pred_fallthru
      _
    // Predicated region
    $region18: #{tpu_custom_call.1} parent=1 // pred_check
      _
    $region19: #{tpu_custom_call.1} parent=1 // pred_check_branch
      %45 = sbr.rel (0) target = $region21
    $region20: #{tpu_custom_call.1} parent=1 // pred_region
      _
    $region21: #{tpu_custom_call.1} parent=1 // pred_fallthru
      _
    // Predicated region
    $region22: #{tpu_custom_call.1} parent=1 // pred_check
      _
    $region23: #{tpu_custom_call.1} parent=1 // pred_check_branch
      %47 = sbr.rel (0) target = $region25
    $region24: #{tpu_custom_call.1} parent=1 // pred_region
      _
    $region25: #{tpu_custom_call.1} parent=1 // pred_fallthru
      _
    // Predicated region
    $region26: #{tpu_custom_call.1} parent=1 // pred_check
      _
    $region27: #{tpu_custom_call.1} parent=1 // pred_check_branch
      %49 = sbr.rel (0) target = $region29
    $region28: #{tpu_custom_call.1} parent=1 // pred_region
      _
    $region29: #{tpu_custom_call.1} parent=1 // pred_fallthru
      _
    // Predicated region
    $region30: #{tpu_custom_call.1} parent=1 // pred_check
      _
    $region31: #{tpu_custom_call.1} parent=1 // pred_check_branch
      %51 = sbr.rel (0) target = $region33
    $region32: #{tpu_custom_call.1} parent=1 // pred_region
      _
    $region33: #{tpu_custom_call.1} parent=1 // pred_fallthru
      _
    // Predicated region
    $region34: #{tpu_custom_call.1} parent=1 // pred_check
      _
    $region35: #{tpu_custom_call.1} parent=1 // pred_check_branch
      %53 = sbr.rel (0) target = $region37
    $region36: #{tpu_custom_call.1} parent=1 // pred_region
      %55 = dma.done [#allocation5], 256
    $region37: #{tpu_custom_call.1} parent=1 // pred_fallthru
      _
    // Predicated region
    $region38: #{tpu_custom_call.1} parent=1 // pred_check
      _
    $region39: #{tpu_custom_call.1} parent=1 // pred_check_branch
      %57 = sbr.rel (0) target = $region41
    $region40: #{tpu_custom_call.1} parent=1 // pred_region
      %59 = dma.done [#allocation8], 1024
    $region41: #{tpu_custom_call.1} parent=1 // pred_fallthru
      _
    %60 = vst [vmem:[#allocation2] sm:$0xff] 0.0
    %61 = vst [vmem:[#allocation2 + $0x8] sm:$0xff] 0.0
    %vm62 = vcmask 273408
    %63 = vst.msk [vmem:[#allocation2 + $0x10] sm:$0xf] %vm62, 0.0
    %v64 = vld [vmem:[#allocation4] sm:$0xff]
    %v65 = vld [vmem:[#allocation4 + $0x8] sm:$0xff]
    %68 = vrot.lane.b32.xlu0 %v64, 17
    %v69 = vpop.permute.xlu0 %68
    %70 = vrot.lane.b32.xlu0 %v65, 17
    %v71 = vpop.permute.xlu0 %70
    %v72 = vrot.slane %v69, 4
    %v73 = vrot.slane %v71, 4
    %vm74 = vcmask 138240
    %v75 = vsel %vm74, %v72, %v69
    %vm76 = vcmask 1043456
    %v77 = vsel %vm76, %v72, %v73
    %v78 = vsel %vm74, %v77, %v71
    %vm82 = vcmask 1043592
    %vm83 = vcmask 1047556
    %vm84 = vmor %vm83, %vm82
    %85 = vst.msk [vmem:[#allocation2] sm:$0xff] %vm84, %v75
    %86 = vst [vmem:[#allocation2 + $0x8] sm:$0xff] %v78
    %vm87 = vcmask 134144
    %88 = vst.msk [vmem:[#allocation2 + $0x10] sm:$0xf] %vm87, %v73
    %v89 = vld [vmem:[#allocation2] sm:$0xff]
    %v90 = vld [vmem:[#allocation2 + $0x8] sm:$0xff]
    %v91 = vld [vmem:[#allocation7] ss:$8 sm:$0xf]
    %v93 = vperm.slane %v91, 0
    %v94 = vperm.slane %v91, 1
    %v95 = vperm.slane %v91, 2
    %v96 = vperm.slane %v91, 3
    %v97 = vrot.slane %v94, 4
    %v98 = vrot.slane %v96, 4
    %v99 = vsel %vm76, %v93, %v97
    %v100 = vsel %vm76, %v95, %v98
    %v103 = vmul.f32 %v89, %v99
    %v104 = vmul.f32 %v90, %v100
    %107 = vst [vmem:[#allocation1] ss:$2 sm:$0xff] %v103
    %s108 = scalar_lea.vmem [#allocation1], 16
    %109 = vst [vmem:[%s108] ss:$2 sm:$0xff] %v104
    %v110 = vld.sshfl [vmem:[#allocation1] sm:$0xff pattern:$0x75316420]
    %v111 = vld.sshfl [vmem:[#allocation1 + $0x8] sm:$0xff pattern:$0x75316420]
    %v112 = vld.sshfl [vmem:[#allocation1 + $0x10] sm:$0xff pattern:$0x75316420]
    %v113 = vld.sshfl [vmem:[#allocation1 + $0x18] sm:$0xff pattern:$0x75316420]
    %118 = vst [vmem:[#allocation3] sm:$0xf] %v110
    %119 = vst [vmem:[#allocation3 + $0x8] sm:$0xf] %v111
    %120 = vst [vmem:[#allocation3 + $0x10] sm:$0xf] %v112
    %121 = vst [vmem:[#allocation3 + $0x18] sm:$0xf] %v113
    %v122 = vld [vmem:[#allocation2] sm:$0xff]
    %v123 = vld [vmem:[#allocation2 + $0x8] sm:$0xff]
    %v124 = vld [vmem:[#allocation2 + $0x10] sm:$0xf]
    %s125 = scalar_lea.vmem [#allocation7], 1
    %v126 = vld [vmem:[%s125] ss:$8 sm:$0xf]
    %v128 = vperm.slane %v126, 0
    %v129 = vperm.slane %v126, 1
    %v130 = vperm.slane %v126, 2
    %v131 = vperm.slane %v126, 3
    %v132 = vrot.slane %v129, 4
    %v133 = vrot.slane %v131, 4
    %v134 = vsel %vm76, %v128, %v132
    %v135 = vsel %vm76, %v130, %v133
    %136 = vrot.lane.b32.xlu0 %v134, 1
    %v137 = vpop.permute.xlu0 %136
    %138 = vrot.lane.b32.xlu0 %v135, 1
    %v139 = vpop.permute.xlu0 %138
    %v140 = vrot.slane %v137, 4
    %v141 = vrot.slane %v139, 4
    %vm142 = vcmask 7168
    %v143 = vsel %vm142, %v140, %v137
    %v144 = vsel %vm76, %v140, %v141
    %v145 = vsel %vm142, %v144, %v139
    %v149 = vmul.f32 %v122, %v143
    %v150 = vmul.f32 %v123, %v145
    %v151 = vmul.f32 %v124, %v141
    %s155 = scalar_lea.vmem [#allocation1], 1
    %156 = vst [vmem:[%s155] ss:$2 sm:$0xff] %v149
    %s157 = scalar_lea.vmem [#allocation1], 17
    %158 = vst [vmem:[%s157] ss:$2 sm:$0xff] %v150
    %s159 = scalar_lea.vmem [#allocation1], 33
    %160 = vst [vmem:[%s159] ss:$2 sm:$0xff] %v151
    %v161 = vld.sshfl [vmem:[#allocation1] sm:$0xff pattern:$0x75316420]
    %v162 = vld.sshfl [vmem:[#allocation1 + $0x8] sm:$0xff pattern:$0x75316420]
    %v163 = vld.sshfl [vmem:[#allocation1 + $0x10] sm:$0xff pattern:$0x75316420]
    %v164 = vld.sshfl [vmem:[#allocation1 + $0x18] sm:$0xff pattern:$0x75316420]
    %v165 = vld.sshfl [vmem:[#allocation1 + $0x20] sm:$0xff pattern:$0x75316420]
    %166 = vrot.lane.b32.xlu0 %v161, 127
    %v167 = vpop.permute.xlu0 %166
    %168 = vrot.lane.b32.xlu0 %v162, 127
    %v169 = vpop.permute.xlu0 %168
    %170 = vrot.lane.b32.xlu0 %v163, 127
    %v171 = vpop.permute.xlu0 %170
    %172 = vrot.lane.b32.xlu0 %v164, 127
    %v173 = vpop.permute.xlu0 %172
    %174 = vrot.lane.b32.xlu0 %v165, 127
    %v175 = vpop.permute.xlu0 %174
    %vm176 = vcmask 1039360
    %v177 = vsel %vm176, %v167, %v169
    %v178 = vsel %vm176, %v169, %v171
    %v179 = vsel %vm176, %v171, %v173
    %v180 = vsel %vm176, %v173, %v175
    %185 = vst [vmem:[#allocation3] sm:$0xf0] %v177
    %186 = vst [vmem:[#allocation3 + $0x8] sm:$0xf0] %v178
    %187 = vst [vmem:[#allocation3 + $0x10] sm:$0xf0] %v179
    %188 = vst [vmem:[#allocation3 + $0x18] sm:$0xf0] %v180
    %v189 = vld [vmem:[#allocation2] sm:$0xff]
    %v190 = vld [vmem:[#allocation2 + $0x8] sm:$0xff]
    %v191 = vld [vmem:[#allocation2 + $0x10] sm:$0xf]
    %s192 = scalar_lea.vmem [#allocation7], 2
    %v193 = vld [vmem:[%s192] ss:$8 sm:$0xf]
    %v195 = vperm.slane %v193, 0
    %v196 = vperm.slane %v193, 1
    %v197 = vperm.slane %v193, 2
    %v198 = vperm.slane %v193, 3
    %v199 = vrot.slane %v196, 4
    %v200 = vrot.slane %v198, 4
    %v201 = vsel %vm76, %v195, %v199
    %v202 = vsel %vm76, %v197, %v200
    %203 = vrot.lane.b32.xlu0 %v201, 2
    %v204 = vpop.permute.xlu0 %203
    %205 = vrot.lane.b32.xlu0 %v202, 2
    %v206 = vpop.permute.xlu0 %205
    %v207 = vrot.slane %v204, 4
    %v208 = vrot.slane %v206, 4
    %vm209 = vcmask 15360
    %v210 = vsel %vm209, %v207, %v204
    %v211 = vsel %vm76, %v207, %v208
    %v212 = vsel %vm209, %v211, %v206
    %v216 = vmul.f32 %v189, %v210
    %v217 = vmul.f32 %v190, %v212
    %v218 = vmul.f32 %v191, %v208
    %222 = vst [vmem:[#allocation1] ss:$2 sm:$0xff] %v216
    %s223 = scalar_lea.vmem [#allocation1], 16
    %224 = vst [vmem:[%s223] ss:$2 sm:$0xff] %v217
    %s225 = scalar_lea.vmem [#allocation1], 32
    %226 = vst [vmem:[%s225] ss:$2 sm:$0xff] %v218
    %v227 = vld.sshfl [vmem:[#allocation1] sm:$0xff pattern:$0x75316420]
    %v228 = vld.sshfl [vmem:[#allocation1 + $0x8] sm:$0xff pattern:$0x75316420]
    %v229 = vld.sshfl [vmem:[#allocation1 + $0x10] sm:$0xff pattern:$0x75316420]
    %v230 = vld.sshfl [vmem:[#allocation1 + $0x18] sm:$0xff pattern:$0x75316420]
    %v231 = vld.sshfl [vmem:[#allocation1 + $0x20] sm:$0xff pattern:$0x75316420]
    %232 = vrot.lane.b32.xlu0 %v227, 126
    %v233 = vpop.permute.xlu0 %232
    %234 = vrot.lane.b32.xlu0 %v228, 126
    %v235 = vpop.permute.xlu0 %234
    %236 = vrot.lane.b32.xlu0 %v229, 126
    %v237 = vpop.permute.xlu0 %236
    %238 = vrot.lane.b32.xlu0 %v230, 126
    %v239 = vpop.permute.xlu0 %238
    %240 = vrot.lane.b32.xlu0 %v231, 126
    %v241 = vpop.permute.xlu0 %240
    %vm242 = vcmask 1031168
    %v243 = vsel %vm242, %v233, %v235
    %v244 = vsel %vm242, %v235, %v237
    %v245 = vsel %vm242, %v237, %v239
    %v246 = vsel %vm242, %v239, %v241
    %251 = vst [vmem:[#allocation3 + $0x20] sm:$0xf] %v243
    %252 = vst [vmem:[#allocation3 + $0x28] sm:$0xf] %v244
    %253 = vst [vmem:[#allocation3 + $0x30] sm:$0xf] %v245
    %254 = vst [vmem:[#allocation3 + $0x38] sm:$0xf] %v246
    %v255 = vld [vmem:[#allocation2] sm:$0xff]
    %v256 = vld [vmem:[#allocation2 + $0x8] sm:$0xff]
    %v257 = vld [vmem:[#allocation2 + $0x10] sm:$0xf]
    %s258 = scalar_lea.vmem [#allocation7], 3
    %v259 = vld [vmem:[%s258] ss:$8 sm:$0xf]
    %v261 = vperm.slane %v259, 0
    %v262 = vperm.slane %v259, 1
    %v263 = vperm.slane %v259, 2
    %v264 = vperm.slane %v259, 3
    %v265 = vrot.slane %v262, 4
    %v266 = vrot.slane %v264, 4
    %v267 = vsel %vm76, %v261, %v265
    %v268 = vsel %vm76, %v263, %v266
    %269 = vrot.lane.b32.xlu0 %v267, 16
    %v270 = vpop.permute.xlu0 %269
    %271 = vrot.lane.b32.xlu0 %v268, 16
    %v272 = vpop.permute.xlu0 %271
    %v273 = vrot.slane %v270, 4
    %v274 = vrot.slane %v272, 4
    %vm275 = vcmask 130048
    %v276 = vsel %vm275, %v273, %v270
    %v277 = vsel %vm76, %v273, %v274
    %v278 = vsel %vm275, %v277, %v272
    %v282 = vmul.f32 %v255, %v276
    %v283 = vmul.f32 %v256, %v278
    %v284 = vmul.f32 %v257, %v274
    %s288 = scalar_lea.vmem [#allocation1], 1
    %289 = vst [vmem:[%s288] ss:$2 sm:$0xff] %v282
    %s290 = scalar_lea.vmem [#allocation1], 17
    %291 = vst [vmem:[%s290] ss:$2 sm:$0xff] %v283
    %s292 = scalar_lea.vmem [#allocation1], 33
    %293 = vst [vmem:[%s292] ss:$2 sm:$0xff] %v284
    %v294 = vld.sshfl [vmem:[#allocation1] sm:$0xff pattern:$0x75316420]
    %v295 = vld.sshfl [vmem:[#allocation1 + $0x8] sm:$0xff pattern:$0x75316420]
    %v296 = vld.sshfl [vmem:[#allocation1 + $0x10] sm:$0xff pattern:$0x75316420]
    %v297 = vld.sshfl [vmem:[#allocation1 + $0x18] sm:$0xff pattern:$0x75316420]
    %v298 = vld.sshfl [vmem:[#allocation1 + $0x20] sm:$0xff pattern:$0x75316420]
    %299 = vrot.lane.b32.xlu0 %v294, 112
    %v300 = vpop.permute.xlu0 %299
    %301 = vrot.lane.b32.xlu0 %v295, 112
    %v302 = vpop.permute.xlu0 %301
    %303 = vrot.lane.b32.xlu0 %v296, 112
    %v304 = vpop.permute.xlu0 %303
    %305 = vrot.lane.b32.xlu0 %v297, 112
    %v306 = vpop.permute.xlu0 %305
    %307 = vrot.lane.b32.xlu0 %v298, 112
    %v308 = vpop.permute.xlu0 %307
    %vm309 = vcmask 916480
    %v310 = vsel %vm309, %v300, %v302
    %v311 = vsel %vm309, %v302, %v304
    %v312 = vsel %vm309, %v304, %v306
    %v313 = vsel %vm309, %v306, %v308
    %318 = vst [vmem:[#allocation3 + $0x20] sm:$0xf0] %v310
    %319 = vst [vmem:[#allocation3 + $0x28] sm:$0xf0] %v311
    %320 = vst [vmem:[#allocation3 + $0x30] sm:$0xf0] %v312
    %321 = vst [vmem:[#allocation3 + $0x38] sm:$0xf0] %v313
    %v322 = vld [vmem:[#allocation2] sm:$0xff]
    %v323 = vld [vmem:[#allocation2 + $0x8] sm:$0xff]
    %v324 = vld [vmem:[#allocation2 + $0x10] sm:$0xf]
    %s325 = scalar_lea.vmem [#allocation7], 4
    %v326 = vld [vmem:[%s325] ss:$8 sm:$0xf]
    %v328 = vperm.slane %v326, 0
    %v329 = vperm.slane %v326, 1
    %v330 = vperm.slane %v326, 2
    %v331 = vperm.slane %v326, 3
    %v332 = vrot.slane %v329, 4
    %v333 = vrot.slane %v331, 4
    %v334 = vsel %vm76, %v328, %v332
    %v335 = vsel %vm76, %v330, %v333
    %336 = vrot.lane.b32.xlu0 %v334, 17
    %v337 = vpop.permute.xlu0 %336
    %338 = vrot.lane.b32.xlu0 %v335, 17
    %v339 = vpop.permute.xlu0 %338
    %v340 = vrot.slane %v337, 4
    %v341 = vrot.slane %v339, 4
    %v342 = vsel %vm74, %v340, %v337
    %v343 = vsel %vm76, %v340, %v341
    %v344 = vsel %vm74, %v343, %v339
    %v348 = vmul.f32 %v322, %v342
    %v349 = vmul.f32 %v323, %v344
    %v350 = vmul.f32 %v324, %v341
    %354 = vst [vmem:[#allocation1] ss:$2 sm:$0xff] %v348
    %s355 = scalar_lea.vmem [#allocation1], 16
    %356 = vst [vmem:[%s355] ss:$2 sm:$0xff] %v349
    %s357 = scalar_lea.vmem [#allocation1], 32
    %358 = vst [vmem:[%s357] ss:$2 sm:$0xff] %v350
    %v359 = vld.sshfl [vmem:[#allocation1] sm:$0xff pattern:$0x75316420]
    %v360 = vld.sshfl [vmem:[#allocation1 + $0x8] sm:$0xff pattern:$0x75316420]
    %v361 = vld.sshfl [vmem:[#allocation1 + $0x10] sm:$0xff pattern:$0x75316420]
    %v362 = vld.sshfl [vmem:[#allocation1 + $0x18] sm:$0xff pattern:$0x75316420]
    %v363 = vld.sshfl [vmem:[#allocation1 + $0x20] sm:$0xff pattern:$0x75316420]
    %364 = vrot.lane.b32.xlu0 %v359, 111
    %v365 = vpop.permute.xlu0 %364
    %366 = vrot.lane.b32.xlu0 %v360, 111
    %v367 = vpop.permute.xlu0 %366
    %368 = vrot.lane.b32.xlu0 %v361, 111
    %v369 = vpop.permute.xlu0 %368
    %370 = vrot.lane.b32.xlu0 %v362, 111
    %v371 = vpop.permute.xlu0 %370
    %372 = vrot.lane.b32.xlu0 %v363, 111
    %v373 = vpop.permute.xlu0 %372
    %vm374 = vcmask 908288
    %v375 = vsel %vm374, %v365, %v367
    %v376 = vsel %vm374, %v367, %v369
    %v377 = vsel %vm374, %v369, %v371
    %v378 = vsel %vm374, %v371, %v373
    %383 = vst [vmem:[#allocation3 + $0x40] sm:$0xf] %v375
    %384 = vst [vmem:[#allocation3 + $0x48] sm:$0xf] %v376
    %385 = vst [vmem:[#allocation3 + $0x50] sm:$0xf] %v377
    %386 = vst [vmem:[#allocation3 + $0x58] sm:$0xf] %v378
    %v387 = vld [vmem:[#allocation2] sm:$0xff]
    %v388 = vld [vmem:[#allocation2 + $0x8] sm:$0xff]
    %v389 = vld [vmem:[#allocation2 + $0x10] sm:$0xf]
    %s390 = scalar_lea.vmem [#allocation7], 5
    %v391 = vld [vmem:[%s390] ss:$8 sm:$0xf]
    %v393 = vperm.slane %v391, 0
    %v394 = vperm.slane %v391, 1
    %v395 = vperm.slane %v391, 2
    %v396 = vperm.slane %v391, 3
    %v397 = vrot.slane %v394, 4
    %v398 = vrot.slane %v396, 4
    %v399 = vsel %vm76, %v393, %v397
    %v400 = vsel %vm76, %v395, %v398
    %401 = vrot.lane.b32.xlu0 %v399, 18
    %v402 = vpop.permute.xlu0 %401
    %403 = vrot.lane.b32.xlu0 %v400, 18
    %v404 = vpop.permute.xlu0 %403
    %v405 = vrot.slane %v402, 4
    %v406 = vrot.slane %v404, 4
    %vm407 = vcmask 146432
    %v408 = vsel %vm407, %v405, %v402
    %v409 = vsel %vm76, %v405, %v406
    %v410 = vsel %vm407, %v409, %v404
    %v414 = vmul.f32 %v387, %v408
    %v415 = vmul.f32 %v388, %v410
    %v416 = vmul.f32 %v389, %v406
    %s420 = scalar_lea.vmem [#allocation1], 1
    %421 = vst [vmem:[%s420] ss:$2 sm:$0xff] %v414
    %s422 = scalar_lea.vmem [#allocation1], 17
    %423 = vst [vmem:[%s422] ss:$2 sm:$0xff] %v415
    %s424 = scalar_lea.vmem [#allocation1], 33
    %425 = vst [vmem:[%s424] ss:$2 sm:$0xff] %v416
    %v426 = vld.sshfl [vmem:[#allocation1] sm:$0xff pattern:$0x75316420]
    %v427 = vld.sshfl [vmem:[#allocation1 + $0x8] sm:$0xff pattern:$0x75316420]
    %v428 = vld.sshfl [vmem:[#allocation1 + $0x10] sm:$0xff pattern:$0x75316420]
    %v429 = vld.sshfl [vmem:[#allocation1 + $0x18] sm:$0xff pattern:$0x75316420]
    %v430 = vld.sshfl [vmem:[#allocation1 + $0x20] sm:$0xff pattern:$0x75316420]
    %431 = vrot.lane.b32.xlu0 %v426, 110
    %v432 = vpop.permute.xlu0 %431
    %433 = vrot.lane.b32.xlu0 %v427, 110
    %v434 = vpop.permute.xlu0 %433
    %435 = vrot.lane.b32.xlu0 %v428, 110
    %v436 = vpop.permute.xlu0 %435
    %437 = vrot.lane.b32.xlu0 %v429, 110
    %v438 = vpop.permute.xlu0 %437
    %439 = vrot.lane.b32.xlu0 %v430, 110
    %v440 = vpop.permute.xlu0 %439
    %vm441 = vcmask 900096
    %v442 = vsel %vm441, %v432, %v434
    %v443 = vsel %vm441, %v434, %v436
    %v444 = vsel %vm441, %v436, %v438
    %v445 = vsel %vm441, %v438, %v440
    %450 = vst [vmem:[#allocation3 + $0x40] sm:$0xf0] %v442
    %451 = vst [vmem:[#allocation3 + $0x48] sm:$0xf0] %v443
    %452 = vst [vmem:[#allocation3 + $0x50] sm:$0xf0] %v444
    %453 = vst [vmem:[#allocation3 + $0x58] sm:$0xf0] %v445
    %v454 = vld [vmem:[#allocation2] sm:$0xff]
    %v455 = vld [vmem:[#allocation2 + $0x8] sm:$0xff]
    %v456 = vld [vmem:[#allocation2 + $0x10] sm:$0xf]
    %s457 = scalar_lea.vmem [#allocation7], 6
    %v458 = vld [vmem:[%s457] ss:$8 sm:$0xf]
    %v460 = vperm.slane %v458, 0
    %v461 = vperm.slane %v458, 1
    %v462 = vperm.slane %v458, 2
    %v463 = vperm.slane %v458, 3
    %v464 = vrot.slane %v461, 4
    %v465 = vrot.slane %v463, 4
    %v466 = vsel %vm76, %v460, %v464
    %v467 = vsel %vm76, %v462, %v465
    %468 = vrot.lane.b32.xlu0 %v466, 32
    %v469 = vpop.permute.xlu0 %468
    %470 = vrot.lane.b32.xlu0 %v467, 32
    %v471 = vpop.permute.xlu0 %470
    %v472 = vrot.slane %v469, 4
    %v473 = vrot.slane %v471, 4
    %vm474 = vcmask 261120
    %v475 = vsel %vm474, %v472, %v469
    %v476 = vsel %vm76, %v472, %v473
    %v477 = vsel %vm474, %v476, %v471
    %v481 = vmul.f32 %v454, %v475
    %v482 = vmul.f32 %v455, %v477
    %v483 = vmul.f32 %v456, %v473
    %487 = vst [vmem:[#allocation1] ss:$2 sm:$0xff] %v481
    %s488 = scalar_lea.vmem [#allocation1], 16
    %489 = vst [vmem:[%s488] ss:$2 sm:$0xff] %v482
    %s490 = scalar_lea.vmem [#allocation1], 32
    %491 = vst [vmem:[%s490] ss:$2 sm:$0xff] %v483
    %v492 = vld.sshfl [vmem:[#allocation1] sm:$0xff pattern:$0x75316420]
    %v493 = vld.sshfl [vmem:[#allocation1 + $0x8] sm:$0xff pattern:$0x75316420]
    %v494 = vld.sshfl [vmem:[#allocation1 + $0x10] sm:$0xff pattern:$0x75316420]
    %v495 = vld.sshfl [vmem:[#allocation1 + $0x18] sm:$0xff pattern:$0x75316420]
    %v496 = vld.sshfl [vmem:[#allocation1 + $0x20] sm:$0xff pattern:$0x75316420]
    %497 = vrot.lane.b32.xlu0 %v492, 96
    %v498 = vpop.permute.xlu0 %497
    %499 = vrot.lane.b32.xlu0 %v493, 96
    %v500 = vpop.permute.xlu0 %499
    %501 = vrot.lane.b32.xlu0 %v494, 96
    %v502 = vpop.permute.xlu0 %501
    %503 = vrot.lane.b32.xlu0 %v495, 96
    %v504 = vpop.permute.xlu0 %503
    %505 = vrot.lane.b32.xlu0 %v496, 96
    %v506 = vpop.permute.xlu0 %505
    %vm507 = vcmask 785408
    %v508 = vsel %vm507, %v498, %v500
    %v509 = vsel %vm507, %v500, %v502
    %v510 = vsel %vm507, %v502, %v504
    %v511 = vsel %vm507, %v504, %v506
    %516 = vst [vmem:[#allocation3 + $0x60] sm:$0xf] %v508
    %517 = vst [vmem:[#allocation3 + $0x68] sm:$0xf] %v509
    %518 = vst [vmem:[#allocation3 + $0x70] sm:$0xf] %v510
    %519 = vst [vmem:[#allocation3 + $0x78] sm:$0xf] %v511
    %v520 = vld [vmem:[#allocation2] sm:$0xff]
    %v521 = vld [vmem:[#allocation2 + $0x8] sm:$0xff]
    %v522 = vld [vmem:[#allocation2 + $0x10] sm:$0xf]
    %s523 = scalar_lea.vmem [#allocation7], 7
    %v524 = vld [vmem:[%s523] ss:$8 sm:$0xf]
    %v526 = vperm.slane %v524, 0
    %v527 = vperm.slane %v524, 1
    %v528 = vperm.slane %v524, 2
    %v529 = vperm.slane %v524, 3
    %v530 = vrot.slane %v527, 4
    %v531 = vrot.slane %v529, 4
    %v532 = vsel %vm76, %v526, %v530
    %v533 = vsel %vm76, %v528, %v531
    %534 = vrot.lane.b32.xlu0 %v532, 33
    %v535 = vpop.permute.xlu0 %534
    %536 = vrot.lane.b32.xlu0 %v533, 33
    %v537 = vpop.permute.xlu0 %536
    %v538 = vrot.slane %v535, 4
    %v539 = vrot.slane %v537, 4
    %vm540 = vcmask 269312
    %v541 = vsel %vm540, %v538, %v535
    %v542 = vsel %vm76, %v538, %v539
    %v543 = vsel %vm540, %v542, %v537
    %v547 = vmul.f32 %v520, %v541
    %v548 = vmul.f32 %v521, %v543
    %v549 = vmul.f32 %v522, %v539
    %s553 = scalar_lea.vmem [#allocation1], 1
    %554 = vst [vmem:[%s553] ss:$2 sm:$0xff] %v547
    %s555 = scalar_lea.vmem [#allocation1], 17
    %556 = vst [vmem:[%s555] ss:$2 sm:$0xff] %v548
    %s557 = scalar_lea.vmem [#allocation1], 33
    %558 = vst [vmem:[%s557] ss:$2 sm:$0xff] %v549
    %v559 = vld.sshfl [vmem:[#allocation1] sm:$0xff pattern:$0x75316420]
    %v560 = vld.sshfl [vmem:[#allocation1 + $0x8] sm:$0xff pattern:$0x75316420]
    %v561 = vld.sshfl [vmem:[#allocation1 + $0x10] sm:$0xff pattern:$0x75316420]
    %v562 = vld.sshfl [vmem:[#allocation1 + $0x18] sm:$0xff pattern:$0x75316420]
    %v563 = vld.sshfl [vmem:[#allocation1 + $0x20] sm:$0xff pattern:$0x75316420]
    %564 = vrot.lane.b32.xlu0 %v559, 95
    %v565 = vpop.permute.xlu0 %564
    %566 = vrot.lane.b32.xlu0 %v560, 95
    %v567 = vpop.permute.xlu0 %566
    %568 = vrot.lane.b32.xlu0 %v561, 95
    %v569 = vpop.permute.xlu0 %568
    %570 = vrot.lane.b32.xlu0 %v562, 95
    %v571 = vpop.permute.xlu0 %570
    %572 = vrot.lane.b32.xlu0 %v563, 95
    %v573 = vpop.permute.xlu0 %572
    %vm574 = vcmask 777216
    %v575 = vsel %vm574, %v565, %v567
    %v576 = vsel %vm574, %v567, %v569
    %v577 = vsel %vm574, %v569, %v571
    %v578 = vsel %vm574, %v571, %v573
    %583 = vst [vmem:[#allocation3 + $0x60] sm:$0xf0] %v575
    %584 = vst [vmem:[#allocation3 + $0x68] sm:$0xf0] %v576
    %585 = vst [vmem:[#allocation3 + $0x70] sm:$0xf0] %v577
    %586 = vst [vmem:[#allocation3 + $0x78] sm:$0xf0] %v578
    %v587 = vld [vmem:[#allocation2] sm:$0xff]
    %v588 = vld [vmem:[#allocation2 + $0x8] sm:$0xff]
    %v589 = vld [vmem:[#allocation2 + $0x10] sm:$0xf]
    %s590 = scalar_lea.vmem [#allocation7], 32
    %v591 = vld [vmem:[%s590] ss:$8 sm:$0xf]
    %v593 = vperm.slane %v591, 0
    %v594 = vperm.slane %v591, 1
    %v595 = vperm.slane %v591, 2
    %v596 = vperm.slane %v591, 3
    %v597 = vrot.slane %v594, 4
    %v598 = vrot.slane %v596, 4
    %v599 = vsel %vm76, %v593, %v597
    %v600 = vsel %vm76, %v595, %v598
    %601 = vrot.lane.b32.xlu0 %v599, 34
    %v602 = vpop.permute.xlu0 %601
    %603 = vrot.lane.b32.xlu0 %v600, 34
    %v604 = vpop.permute.xlu0 %603
    %v605 = vrot.slane %v602, 4
    %v606 = vrot.slane %v604, 4
    %vm607 = vcmask 277504
    %v608 = vsel %vm607, %v605, %v602
    %v609 = vsel %vm76, %v605, %v606
    %v610 = vsel %vm607, %v609, %v604
    %v614 = vmul.f32 %v587, %v608
    %v615 = vmul.f32 %v588, %v610
    %v616 = vmul.f32 %v589, %v606
    %620 = vst [vmem:[#allocation1] ss:$2 sm:$0xff] %v614
    %s621 = scalar_lea.vmem [#allocation1], 16
    %622 = vst [vmem:[%s621] ss:$2 sm:$0xff] %v615
    %s623 = scalar_lea.vmem [#allocation1], 32
    %624 = vst [vmem:[%s623] ss:$2 sm:$0xff] %v616
    %v625 = vld.sshfl [vmem:[#allocation1] sm:$0xff pattern:$0x75316420]
    %v626 = vld.sshfl [vmem:[#allocation1 + $0x8] sm:$0xff pattern:$0x75316420]
    %v627 = vld.sshfl [vmem:[#allocation1 + $0x10] sm:$0xff pattern:$0x75316420]
    %v628 = vld.sshfl [vmem:[#allocation1 + $0x18] sm:$0xff pattern:$0x75316420]
    %v629 = vld.sshfl [vmem:[#allocation1 + $0x20] sm:$0xff pattern:$0x75316420]
    %630 = vrot.lane.b32.xlu0 %v625, 94
    %v631 = vpop.permute.xlu0 %630
    %632 = vrot.lane.b32.xlu0 %v626, 94
    %v633 = vpop.permute.xlu0 %632
    %634 = vrot.lane.b32.xlu0 %v627, 94
    %v635 = vpop.permute.xlu0 %634
    %636 = vrot.lane.b32.xlu0 %v628, 94
    %v637 = vpop.permute.xlu0 %636
    %638 = vrot.lane.b32.xlu0 %v629, 94
    %v639 = vpop.permute.xlu0 %638
    %vm640 = vcmask 769024
    %v641 = vsel %vm640, %v631, %v633
    %v642 = vsel %vm640, %v633, %v635
    %v643 = vsel %vm640, %v635, %v637
    %v644 = vsel %vm640, %v637, %v639
    %649 = vst [vmem:[#allocation3 + $0x80] sm:$0xf] %v641
    %650 = vst [vmem:[#allocation3 + $0x88] sm:$0xf] %v642
    %651 = vst [vmem:[#allocation3 + $0x90] sm:$0xf] %v643
    %652 = vst [vmem:[#allocation3 + $0x98] sm:$0xf] %v644
    %v653 = vld [vmem:[%s2] sm:$0xf]
    %v654 = vld [vmem:[#allocation3] sm:$0xff]
    %v655 = vld [vmem:[#allocation3 + $0x8] sm:$0xff]
    %v656 = vld [vmem:[#allocation3 + $0x10] sm:$0xff]
    %v657 = vld [vmem:[#allocation3 + $0x18] sm:$0xff]
    %v658 = vld [vmem:[#allocation3 + $0x20] sm:$0xff]
    %v659 = vld [vmem:[#allocation3 + $0x28] sm:$0xff]
    %v660 = vld [vmem:[#allocation3 + $0x30] sm:$0xff]
    %v661 = vld [vmem:[#allocation3 + $0x38] sm:$0xff]
    %v662 = vld [vmem:[#allocation3 + $0x40] sm:$0xff]
    %v663 = vld [vmem:[#allocation3 + $0x48] sm:$0xff]
    %v664 = vld [vmem:[#allocation3 + $0x50] sm:$0xff]
    %v665 = vld [vmem:[#allocation3 + $0x58] sm:$0xff]
    %v666 = vld [vmem:[#allocation3 + $0x60] sm:$0xff]
    %v667 = vld [vmem:[#allocation3 + $0x68] sm:$0xff]
    %v668 = vld [vmem:[#allocation3 + $0x70] sm:$0xff]
    %v669 = vld [vmem:[#allocation3 + $0x78] sm:$0xff]
    %v670 = vld [vmem:[#allocation3 + $0x80] sm:$0xf]
    %v671 = vld [vmem:[#allocation3 + $0x88] sm:$0xf]
    %v672 = vld [vmem:[#allocation3 + $0x90] sm:$0xf]
    %v673 = vld [vmem:[#allocation3 + $0x98] sm:$0xf]
    %vm674 = vcmask 293888
    %v676 = vsel %vm674, %v653, 0
    %v679 = vsel %vm76, %v670, 0
    %v682 = vsel %vm76, %v671, 0
    %v685 = vsel %vm76, %v672, 0
    %v688 = vsel %vm76, %v673, 0
    %690 = vmatpush.msra.mxu0 0.0
    %691 = vmatpush.msra.mxu0 0.0
    %692 = vmatpush.msra.mxu0 0.0
    %693 = vmatpush.msra.mxu0 0.0
    %694 = vmatpush.msra.mxu0 0.0
    %695 = vmatpush.msra.mxu0 0.0
    %696 = vmatpush.msra.mxu0 0.0
    %697 = vmatpush.msra.mxu0 0.0
    %698 = vmatpush.msra.mxu0 0.0
    %699 = vmatpush.msra.mxu0 0.0
    %700 = vmatpush.msra.mxu0 0.0
    %701 = vmatpush.msra.mxu0 %v679
    %702 = vmatpush.msra.mxu0 %v666
    %703 = vmatpush.msra.mxu0 %v662
    %704 = vmatpush.msra.mxu0 %v658
    %705 = vmatpush.msra.mxu0 %v654
    %706 = vmatmul.f32.gmra.mxu0 %v676
    %v707 = vpop.f32.mrf.mxu0
    %v708 = vadd.f32 0.0, %v707
    %709 = vdwg.mxu0
    %710 = vmatpush.msra.mxu0 0.0
    %711 = vmatpush.msra.mxu0 0.0
    %712 = vmatpush.msra.mxu0 0.0
    %713 = vmatpush.msra.mxu0 0.0
    %714 = vmatpush.msra.mxu0 0.0
    %715 = vmatpush.msra.mxu0 0.0
    %716 = vmatpush.msra.mxu0 0.0
    %717 = vmatpush.msra.mxu0 0.0
    %718 = vmatpush.msra.mxu0 0.0
    %719 = vmatpush.msra.mxu0 0.0
    %720 = vmatpush.msra.mxu0 0.0
    %721 = vmatpush.msra.mxu0 %v682
    %722 = vmatpush.msra.mxu0 %v667
    %723 = vmatpush.msra.mxu0 %v663
    %724 = vmatpush.msra.mxu0 %v659
    %725 = vmatpush.msra.mxu0 %v655
    %726 = vmatmul.f32.gmra.mxu0 %v676
    %v727 = vpop.f32.mrf.mxu0
    %v728 = vadd.f32 0.0, %v727
    %729 = vdwg.mxu0
    %730 = vmatpush.msra.mxu0 0.0
    %731 = vmatpush.msra.mxu0 0.0
    %732 = vmatpush.msra.mxu0 0.0
    %733 = vmatpush.msra.mxu0 0.0
    %734 = vmatpush.msra.mxu0 0.0
    %735 = vmatpush.msra.mxu0 0.0
    %736 = vmatpush.msra.mxu0 0.0
    %737 = vmatpush.msra.mxu0 0.0
    %738 = vmatpush.msra.mxu0 0.0
    %739 = vmatpush.msra.mxu0 0.0
    %740 = vmatpush.msra.mxu0 0.0
    %741 = vmatpush.msra.mxu0 %v685
    %742 = vmatpush.msra.mxu0 %v668
    %743 = vmatpush.msra.mxu0 %v664
    %744 = vmatpush.msra.mxu0 %v660
    %745 = vmatpush.msra.mxu0 %v656
    %746 = vmatmul.f32.gmra.mxu0 %v676
    %v747 = vpop.f32.mrf.mxu0
    %v748 = vadd.f32 0.0, %v747
    %749 = vdwg.mxu0
    %750 = vmatpush.msra.mxu0 0.0
    %751 = vmatpush.msra.mxu0 0.0
    %752 = vmatpush.msra.mxu0 0.0
    %753 = vmatpush.msra.mxu0 0.0
    %754 = vmatpush.msra.mxu0 0.0
    %755 = vmatpush.msra.mxu0 0.0
    %756 = vmatpush.msra.mxu0 0.0
    %757 = vmatpush.msra.mxu0 0.0
    %758 = vmatpush.msra.mxu0 0.0
    %759 = vmatpush.msra.mxu0 0.0
    %760 = vmatpush.msra.mxu0 0.0
    %761 = vmatpush.msra.mxu0 %v688
    %762 = vmatpush.msra.mxu0 %v669
    %763 = vmatpush.msra.mxu0 %v665
    %764 = vmatpush.msra.mxu0 %v661
    %765 = vmatpush.msra.mxu0 %v657
    %766 = vmatmul.f32.gmra.mxu0 %v676
    %v767 = vpop.f32.mrf.mxu0
    %v768 = vadd.f32 0.0, %v767
    %769 = vdwg.mxu0
    %v770 = vsel %vm76, %v708, 0.0
    %v771 = vsel %vm76, %v728, 0.0
    %v772 = vadd.f32 %v770, %v771
    %v773 = vsel %vm76, %v748, 0.0
    %v774 = vadd.f32 %v772, %v773
    %v775 = vsel %vm76, %v768, 0.0
    %v776 = vadd.f32 %v774, %v775
    %777 = vadd.xlane.f32.xlu0 %v776
    %v778 = vpop.xlane.xlu0 %777
    %v779 = vrcp.pop 512.0
    %v780 = vmul.f32 512.0, %v779
    %v781 = vsub.f32 1.0, %v780
    %v782 = vmul.f32 %v779, %v781
    %v783 = vadd.f32 %v779, %v782
    %vm784 = vweird.f32 %v779
    %v785 = vsel %vm784, %v779, %v783
    %v786 = vmul.f32 %v778, %v785
    %v787 = vsub.f32 %v708, %v786
    %v788 = vsub.f32 %v728, %v786
    %v789 = vsub.f32 %v748, %v786
    %v790 = vsub.f32 %v768, %v786
    %v791 = vmul.f32 %v787, %v787
    %v792 = vmul.f32 %v788, %v788
    %v793 = vmul.f32 %v789, %v789
    %v794 = vmul.f32 %v790, %v790
    %v795 = vsel %vm76, %v791, 0.0
    %v796 = vsel %vm76, %v792, 0.0
    %v797 = vadd.f32 %v795, %v796
    %v798 = vsel %vm76, %v793, 0.0
    %v799 = vadd.f32 %v797, %v798
    %v800 = vsel %vm76, %v794, 0.0
    %v801 = vadd.f32 %v799, %v800
    %802 = vadd.xlane.f32.xlu0 %v801
    %v803 = vpop.xlane.xlu0 %802
    %v804 = vmul.f32 %v803, %v785
    %v805 = vadd.f32 %v804, 1e-05
    %v806 = vrsqrt.pop %v805
    %v807 = vmul.f32 %v806, %v805
    %v808 = vmul.f32 %v807, %v806
    %v809 = vmul.f32 0.5, %v808
    %v810 = vsub.f32 1.5, %v809
    %v811 = vmul.f32 %v806, %v810
    %vm812 = vweird.f32 %v805
    %vm813 = vweird.f32 %v806
    %vm814 = vmor %vm812, %vm813
    %v815 = vsel %vm814, %v806, %v811
    %v816 = vmul.f32 %v787, %v815
    %v817 = vmul.f32 %v788, %v815
    %v818 = vmul.f32 %v789, %v815
    %v819 = vmul.f32 %v790, %v815
    %v820 = vld [vmem:[%s4] sm:$0xf]
    %822 = vset.pattern.permute.xlu0 0
    %823 = vperm.xlu0 %822, %v820
    %v824 = vpop.permute.xlu0 %823
    %v826 = vmul.f32 %v816, %v824
    %v827 = vmul.f32 %v817, %v824
    %v828 = vmul.f32 %v818, %v824
    %v829 = vmul.f32 %v819, %v824
    %v830 = vld [vmem:[%s5] sm:$0xf]
    %832 = vset.pattern.permute.xlu0 0
    %833 = vperm.xlu0 %832, %v830
    %v834 = vpop.permute.xlu0 %833
    %v836 = vadd.f32 %v826, %v834
    %v837 = vadd.f32 %v827, %v834
    %v838 = vadd.f32 %v828, %v834
    %v839 = vadd.f32 %v829, %v834
    %v840 = vmax.f32 %v836, 0.0
    %v841 = vmax.f32 %v837, 0.0
    %v842 = vmax.f32 %v838, 0.0
    %v843 = vmax.f32 %v839, 0.0
    %v848 = vrot.slane %v841, 4
    %v849 = vrot.slane %v843, 4
    %v850 = vsel %vm76, %v840, %v848
    %v851 = vsel %vm76, %v842, %v849
    %852 = vrot.lane.b32.xlu0 %v850, 17
    %v853 = vpop.permute.xlu0 %852
    %854 = vrot.lane.b32.xlu0 %v851, 17
    %v855 = vpop.permute.xlu0 %854
    %v856 = vrot.slane %v853, 4
    %v857 = vrot.slane %v855, 4
    %v858 = vsel %vm74, %v856, %v853
    %v859 = vsel %vm76, %v856, %v857
    %v860 = vsel %vm74, %v859, %v855
    %864 = vst.msk [vmem:[#allocation2] sm:$0xff] %vm84, %v858
    %865 = vst [vmem:[#allocation2 + $0x8] sm:$0xff] %v860
    %866 = vst.msk [vmem:[#allocation2 + $0x10] sm:$0xf] %vm87, %v857
    %v867 = vld [vmem:[#allocation2] sm:$0xff]
    %v868 = vld [vmem:[#allocation2 + $0x8] sm:$0xff]
    %v869 = vld [vmem:[#allocation7] ss:$8 sm:$0xf]
    %v871 = vperm.slane %v869, 0
    %v872 = vperm.slane %v869, 1
    %v873 = vperm.slane %v869, 2
    %v874 = vperm.slane %v869, 3
    %v875 = vrot.slane %v872, 4
    %v876 = vrot.slane %v874, 4
    %v877 = vsel %vm76, %v871, %v875
    %v878 = vsel %vm76, %v873, %v876
    %v881 = vmul.f32 %v867, %v877
    %v882 = vmul.f32 %v868, %v878
    %885 = vst [vmem:[#allocation1] ss:$2 sm:$0xff] %v881
    %s886 = scalar_lea.vmem [#allocation1], 16
    %887 = vst [vmem:[%s886] ss:$2 sm:$0xff] %v882
    %v888 = vld.sshfl [vmem:[#allocation1] sm:$0xff pattern:$0x75316420]
    %v889 = vld.sshfl [vmem:[#allocation1 + $0x8] sm:$0xff pattern:$0x75316420]
    %v890 = vld.sshfl [vmem:[#allocation1 + $0x10] sm:$0xff pattern:$0x75316420]
    %v891 = vld.sshfl [vmem:[#allocation1 + $0x18] sm:$0xff pattern:$0x75316420]
    %896 = vst [vmem:[#allocation3] sm:$0xf] %v888
    %897 = vst [vmem:[#allocation3 + $0x8] sm:$0xf] %v889
    %898 = vst [vmem:[#allocation3 + $0x10] sm:$0xf] %v890
    %899 = vst [vmem:[#allocation3 + $0x18] sm:$0xf] %v891
    %v900 = vld [vmem:[#allocation2] sm:$0xff]
    %v901 = vld [vmem:[#allocation2 + $0x8] sm:$0xff]
    %v902 = vld [vmem:[#allocation2 + $0x10] sm:$0xf]
    %v903 = vld [vmem:[%s125] ss:$8 sm:$0xf]
    %v905 = vperm.slane %v903, 0
    %v906 = vperm.slane %v903, 1
    %v907 = vperm.slane %v903, 2
    %v908 = vperm.slane %v903, 3
    %v909 = vrot.slane %v906, 4
    %v910 = vrot.slane %v908, 4
    %v911 = vsel %vm76, %v905, %v909
    %v912 = vsel %vm76, %v907, %v910
    %913 = vrot.lane.b32.xlu0 %v911, 1
    %v914 = vpop.permute.xlu0 %913
    %915 = vrot.lane.b32.xlu0 %v912, 1
    %v916 = vpop.permute.xlu0 %915
    %v917 = vrot.slane %v914, 4
    %v918 = vrot.slane %v916, 4
    %v919 = vsel %vm142, %v917, %v914
    %v920 = vsel %vm76, %v917, %v918
    %v921 = vsel %vm142, %v920, %v916
    %v925 = vmul.f32 %v900, %v919
    %v926 = vmul.f32 %v901, %v921
    %v927 = vmul.f32 %v902, %v918
    %s931 = scalar_lea.vmem [#allocation1], 1
    %932 = vst [vmem:[%s931] ss:$2 sm:$0xff] %v925
    %s933 = scalar_lea.vmem [#allocation1], 17
    %934 = vst [vmem:[%s933] ss:$2 sm:$0xff] %v926
    %s935 = scalar_lea.vmem [#allocation1], 33
    %936 = vst [vmem:[%s935] ss:$2 sm:$0xff] %v927
    %v937 = vld.sshfl [vmem:[#allocation1] sm:$0xff pattern:$0x75316420]
    %v938 = vld.sshfl [vmem:[#allocation1 + $0x8] sm:$0xff pattern:$0x75316420]
    %v939 = vld.sshfl [vmem:[#allocation1 + $0x10] sm:$0xff pattern:$0x75316420]
    %v940 = vld.sshfl [vmem:[#allocation1 + $0x18] sm:$0xff pattern:$0x75316420]
    %v941 = vld.sshfl [vmem:[#allocation1 + $0x20] sm:$0xff pattern:$0x75316420]
    %942 = vrot.lane.b32.xlu0 %v937, 127
    %v943 = vpop.permute.xlu0 %942
    %944 = vrot.lane.b32.xlu0 %v938, 127
    %v945 = vpop.permute.xlu0 %944
    %946 = vrot.lane.b32.xlu0 %v939, 127
    %v947 = vpop.permute.xlu0 %946
    %948 = vrot.lane.b32.xlu0 %v940, 127
    %v949 = vpop.permute.xlu0 %948
    %950 = vrot.lane.b32.xlu0 %v941, 127
    %v951 = vpop.permute.xlu0 %950
    %v952 = vsel %vm176, %v943, %v945
    %v953 = vsel %vm176, %v945, %v947
    %v954 = vsel %vm176, %v947, %v949
    %v955 = vsel %vm176, %v949, %v951
    %960 = vst [vmem:[#allocation3] sm:$0xf0] %v952
    %961 = vst [vmem:[#allocation3 + $0x8] sm:$0xf0] %v953
    %962 = vst [vmem:[#allocation3 + $0x10] sm:$0xf0] %v954
    %963 = vst [vmem:[#allocation3 + $0x18] sm:$0xf0] %v955
    %v964 = vld [vmem:[#allocation2] sm:$0xff]
    %v965 = vld [vmem:[#allocation2 + $0x8] sm:$0xff]
    %v966 = vld [vmem:[#allocation2 + $0x10] sm:$0xf]
    %v967 = vld [vmem:[%s192] ss:$8 sm:$0xf]
    %v969 = vperm.slane %v967, 0
    %v970 = vperm.slane %v967, 1
    %v971 = vperm.slane %v967, 2
    %v972 = vperm.slane %v967, 3
    %v973 = vrot.slane %v970, 4
    %v974 = vrot.slane %v972, 4
    %v975 = vsel %vm76, %v969, %v973
    %v976 = vsel %vm76, %v971, %v974
    %977 = vrot.lane.b32.xlu0 %v975, 2
    %v978 = vpop.permute.xlu0 %977
    %979 = vrot.lane.b32.xlu0 %v976, 2
    %v980 = vpop.permute.xlu0 %979
    %v981 = vrot.slane %v978, 4
    %v982 = vrot.slane %v980, 4
    %v983 = vsel %vm209, %v981, %v978
    %v984 = vsel %vm76, %v981, %v982
    %v985 = vsel %vm209, %v984, %v980
    %v989 = vmul.f32 %v964, %v983
    %v990 = vmul.f32 %v965, %v985
    %v991 = vmul.f32 %v966, %v982
    %995 = vst [vmem:[#allocation1] ss:$2 sm:$0xff] %v989
    %s996 = scalar_lea.vmem [#allocation1], 16
    %997 = vst [vmem:[%s996] ss:$2 sm:$0xff] %v990
    %s998 = scalar_lea.vmem [#allocation1], 32
    %999 = vst [vmem:[%s998] ss:$2 sm:$0xff] %v991
    %v1000 = vld.sshfl [vmem:[#allocation1] sm:$0xff pattern:$0x75316420]
    %v1001 = vld.sshfl [vmem:[#allocation1 + $0x8] sm:$0xff pattern:$0x75316420]
    %v1002 = vld.sshfl [vmem:[#allocation1 + $0x10] sm:$0xff pattern:$0x75316420]
    %v1003 = vld.sshfl [vmem:[#allocation1 + $0x18] sm:$0xff pattern:$0x75316420]
    %v1004 = vld.sshfl [vmem:[#allocation1 + $0x20] sm:$0xff pattern:$0x75316420]
    %1005 = vrot.lane.b32.xlu0 %v1000, 126
    %v1006 = vpop.permute.xlu0 %1005
    %1007 = vrot.lane.b32.xlu0 %v1001, 126
    %v1008 = vpop.permute.xlu0 %1007
    %1009 = vrot.lane.b32.xlu0 %v1002, 126
    %v1010 = vpop.permute.xlu0 %1009
    %1011 = vrot.lane.b32.xlu0 %v1003, 126
    %v1012 = vpop.permute.xlu0 %1011
    %1013 = vrot.lane.b32.xlu0 %v1004, 126
    %v1014 = vpop.permute.xlu0 %1013
    %v1015 = vsel %vm242, %v1006, %v1008
    %v1016 = vsel %vm242, %v1008, %v1010
    %v1017 = vsel %vm242, %v1010, %v1012
    %v1018 = vsel %vm242, %v1012, %v1014
    %1023 = vst [vmem:[#allocation3 + $0x20] sm:$0xf] %v1015
    %1024 = vst [vmem:[#allocation3 + $0x28] sm:$0xf] %v1016
    %1025 = vst [vmem:[#allocation3 + $0x30] sm:$0xf] %v1017
    %1026 = vst [vmem:[#allocation3 + $0x38] sm:$0xf] %v1018
    %v1027 = vld [vmem:[#allocation2] sm:$0xff]
    %v1028 = vld [vmem:[#allocation2 + $0x8] sm:$0xff]
    %v1029 = vld [vmem:[#allocation2 + $0x10] sm:$0xf]
    %v1030 = vld [vmem:[%s258] ss:$8 sm:$0xf]
    %v1032 = vperm.slane %v1030, 0
    %v1033 = vperm.slane %v1030, 1
    %v1034 = vperm.slane %v1030, 2
    %v1035 = vperm.slane %v1030, 3
    %v1036 = vrot.slane %v1033, 4
    %v1037 = vrot.slane %v1035, 4
    %v1038 = vsel %vm76, %v1032, %v1036
    %v1039 = vsel %vm76, %v1034, %v1037
    %1040 = vrot.lane.b32.xlu0 %v1038, 16
    %v1041 = vpop.permute.xlu0 %1040
    %1042 = vrot.lane.b32.xlu0 %v1039, 16
    %v1043 = vpop.permute.xlu0 %1042
    %v1044 = vrot.slane %v1041, 4
    %v1045 = vrot.slane %v1043, 4
    %v1046 = vsel %vm275, %v1044, %v1041
    %v1047 = vsel %vm76, %v1044, %v1045
    %v1048 = vsel %vm275, %v1047, %v1043
    %v1052 = vmul.f32 %v1027, %v1046
    %v1053 = vmul.f32 %v1028, %v1048
    %v1054 = vmul.f32 %v1029, %v1045
    %s1058 = scalar_lea.vmem [#allocation1], 1
    %1059 = vst [vmem:[%s1058] ss:$2 sm:$0xff] %v1052
    %s1060 = scalar_lea.vmem [#allocation1], 17
    %1061 = vst [vmem:[%s1060] ss:$2 sm:$0xff] %v1053
    %s1062 = scalar_lea.vmem [#allocation1], 33
    %1063 = vst [vmem:[%s1062] ss:$2 sm:$0xff] %v1054
    %v1064 = vld.sshfl [vmem:[#allocation1] sm:$0xff pattern:$0x75316420]
    %v1065 = vld.sshfl [vmem:[#allocation1 + $0x8] sm:$0xff pattern:$0x75316420]
    %v1066 = vld.sshfl [vmem:[#allocation1 + $0x10] sm:$0xff pattern:$0x75316420]
    %v1067 = vld.sshfl [vmem:[#allocation1 + $0x18] sm:$0xff pattern:$0x75316420]
    %v1068 = vld.sshfl [vmem:[#allocation1 + $0x20] sm:$0xff pattern:$0x75316420]
    %1069 = vrot.lane.b32.xlu0 %v1064, 112
    %v1070 = vpop.permute.xlu0 %1069
    %1071 = vrot.lane.b32.xlu0 %v1065, 112
    %v1072 = vpop.permute.xlu0 %1071
    %1073 = vrot.lane.b32.xlu0 %v1066, 112
    %v1074 = vpop.permute.xlu0 %1073
    %1075 = vrot.lane.b32.xlu0 %v1067, 112
    %v1076 = vpop.permute.xlu0 %1075
    %1077 = vrot.lane.b32.xlu0 %v1068, 112
    %v1078 = vpop.permute.xlu0 %1077
    %v1079 = vsel %vm309, %v1070, %v1072
    %v1080 = vsel %vm309, %v1072, %v1074
    %v1081 = vsel %vm309, %v1074, %v1076
    %v1082 = vsel %vm309, %v1076, %v1078
    %1087 = vst [vmem:[#allocation3 + $0x20] sm:$0xf0] %v1079
    %1088 = vst [vmem:[#allocation3 + $0x28] sm:$0xf0] %v1080
    %1089 = vst [vmem:[#allocation3 + $0x30] sm:$0xf0] %v1081
    %1090 = vst [vmem:[#allocation3 + $0x38] sm:$0xf0] %v1082
    %v1091 = vld [vmem:[#allocation2] sm:$0xff]
    %v1092 = vld [vmem:[#allocation2 + $0x8] sm:$0xff]
    %v1093 = vld [vmem:[#allocation2 + $0x10] sm:$0xf]
    %v1094 = vld [vmem:[%s325] ss:$8 sm:$0xf]
    %v1096 = vperm.slane %v1094, 0
    %v1097 = vperm.slane %v1094, 1
    %v1098 = vperm.slane %v1094, 2
    %v1099 = vperm.slane %v1094, 3
    %v1100 = vrot.slane %v1097, 4
    %v1101 = vrot.slane %v1099, 4
    %v1102 = vsel %vm76, %v1096, %v1100
    %v1103 = vsel %vm76, %v1098, %v1101
    %1104 = vrot.lane.b32.xlu0 %v1102, 17
    %v1105 = vpop.permute.xlu0 %1104
    %1106 = vrot.lane.b32.xlu0 %v1103, 17
    %v1107 = vpop.permute.xlu0 %1106
    %v1108 = vrot.slane %v1105, 4
    %v1109 = vrot.slane %v1107, 4
    %v1110 = vsel %vm74, %v1108, %v1105
    %v1111 = vsel %vm76, %v1108, %v1109
    %v1112 = vsel %vm74, %v1111, %v1107
    %v1116 = vmul.f32 %v1091, %v1110
    %v1117 = vmul.f32 %v1092, %v1112
    %v1118 = vmul.f32 %v1093, %v1109
    %1122 = vst [vmem:[#allocation1] ss:$2 sm:$0xff] %v1116
    %s1123 = scalar_lea.vmem [#allocation1], 16
    %1124 = vst [vmem:[%s1123] ss:$2 sm:$0xff] %v1117
    %s1125 = scalar_lea.vmem [#allocation1], 32
    %1126 = vst [vmem:[%s1125] ss:$2 sm:$0xff] %v1118
    %v1127 = vld.sshfl [vmem:[#allocation1] sm:$0xff pattern:$0x75316420]
    %v1128 = vld.sshfl [vmem:[#allocation1 + $0x8] sm:$0xff pattern:$0x75316420]
    %v1129 = vld.sshfl [vmem:[#allocation1 + $0x10] sm:$0xff pattern:$0x75316420]
    %v1130 = vld.sshfl [vmem:[#allocation1 + $0x18] sm:$0xff pattern:$0x75316420]
    %v1131 = vld.sshfl [vmem:[#allocation1 + $0x20] sm:$0xff pattern:$0x75316420]
    %1132 = vrot.lane.b32.xlu0 %v1127, 111
    %v1133 = vpop.permute.xlu0 %1132
    %1134 = vrot.lane.b32.xlu0 %v1128, 111
    %v1135 = vpop.permute.xlu0 %1134
    %1136 = vrot.lane.b32.xlu0 %v1129, 111
    %v1137 = vpop.permute.xlu0 %1136
    %1138 = vrot.lane.b32.xlu0 %v1130, 111
    %v1139 = vpop.permute.xlu0 %1138
    %1140 = vrot.lane.b32.xlu0 %v1131, 111
    %v1141 = vpop.permute.xlu0 %1140
    %v1142 = vsel %vm374, %v1133, %v1135
    %v1143 = vsel %vm374, %v1135, %v1137
    %v1144 = vsel %vm374, %v1137, %v1139
    %v1145 = vsel %vm374, %v1139, %v1141
    %1150 = vst [vmem:[#allocation3 + $0x40] sm:$0xf] %v1142
    %1151 = vst [vmem:[#allocation3 + $0x48] sm:$0xf] %v1143
    %1152 = vst [vmem:[#allocation3 + $0x50] sm:$0xf] %v1144
    %1153 = vst [vmem:[#allocation3 + $0x58] sm:$0xf] %v1145
    %v1154 = vld [vmem:[#allocation2] sm:$0xff]
    %v1155 = vld [vmem:[#allocation2 + $0x8] sm:$0xff]
    %v1156 = vld [vmem:[#allocation2 + $0x10] sm:$0xf]
    %v1157 = vld [vmem:[%s390] ss:$8 sm:$0xf]
    %v1159 = vperm.slane %v1157, 0
    %v1160 = vperm.slane %v1157, 1
    %v1161 = vperm.slane %v1157, 2
    %v1162 = vperm.slane %v1157, 3
    %v1163 = vrot.slane %v1160, 4
    %v1164 = vrot.slane %v1162, 4
    %v1165 = vsel %vm76, %v1159, %v1163
    %v1166 = vsel %vm76, %v1161, %v1164
    %1167 = vrot.lane.b32.xlu0 %v1165, 18
    %v1168 = vpop.permute.xlu0 %1167
    %1169 = vrot.lane.b32.xlu0 %v1166, 18
    %v1170 = vpop.permute.xlu0 %1169
    %v1171 = vrot.slane %v1168, 4
    %v1172 = vrot.slane %v1170, 4
    %v1173 = vsel %vm407, %v1171, %v1168
    %v1174 = vsel %vm76, %v1171, %v1172
    %v1175 = vsel %vm407, %v1174, %v1170
    %v1179 = vmul.f32 %v1154, %v1173
    %v1180 = vmul.f32 %v1155, %v1175
    %v1181 = vmul.f32 %v1156, %v1172
    %s1185 = scalar_lea.vmem [#allocation1], 1
    %1186 = vst [vmem:[%s1185] ss:$2 sm:$0xff] %v1179
    %s1187 = scalar_lea.vmem [#allocation1], 17
    %1188 = vst [vmem:[%s1187] ss:$2 sm:$0xff] %v1180
    %s1189 = scalar_lea.vmem [#allocation1], 33
    %1190 = vst [vmem:[%s1189] ss:$2 sm:$0xff] %v1181
    %v1191 = vld.sshfl [vmem:[#allocation1] sm:$0xff pattern:$0x75316420]
    %v1192 = vld.sshfl [vmem:[#allocation1 + $0x8] sm:$0xff pattern:$0x75316420]
    %v1193 = vld.sshfl [vmem:[#allocation1 + $0x10] sm:$0xff pattern:$0x75316420]
    %v1194 = vld.sshfl [vmem:[#allocation1 + $0x18] sm:$0xff pattern:$0x75316420]
    %v1195 = vld.sshfl [vmem:[#allocation1 + $0x20] sm:$0xff pattern:$0x75316420]
    %1196 = vrot.lane.b32.xlu0 %v1191, 110
    %v1197 = vpop.permute.xlu0 %1196
    %1198 = vrot.lane.b32.xlu0 %v1192, 110
    %v1199 = vpop.permute.xlu0 %1198
    %1200 = vrot.lane.b32.xlu0 %v1193, 110
    %v1201 = vpop.permute.xlu0 %1200
    %1202 = vrot.lane.b32.xlu0 %v1194, 110
    %v1203 = vpop.permute.xlu0 %1202
    %1204 = vrot.lane.b32.xlu0 %v1195, 110
    %v1205 = vpop.permute.xlu0 %1204
    %v1206 = vsel %vm441, %v1197, %v1199
    %v1207 = vsel %vm441, %v1199, %v1201
    %v1208 = vsel %vm441, %v1201, %v1203
    %v1209 = vsel %vm441, %v1203, %v1205
    %1214 = vst [vmem:[#allocation3 + $0x40] sm:$0xf0] %v1206
    %1215 = vst [vmem:[#allocation3 + $0x48] sm:$0xf0] %v1207
    %1216 = vst [vmem:[#allocation3 + $0x50] sm:$0xf0] %v1208
    %1217 = vst [vmem:[#allocation3 + $0x58] sm:$0xf0] %v1209
    %v1218 = vld [vmem:[#allocation2] sm:$0xff]
    %v1219 = vld [vmem:[#allocation2 + $0x8] sm:$0xff]
    %v1220 = vld [vmem:[#allocation2 + $0x10] sm:$0xf]
    %v1221 = vld [vmem:[%s457] ss:$8 sm:$0xf]
    %v1223 = vperm.slane %v1221, 0
    %v1224 = vperm.slane %v1221, 1
    %v1225 = vperm.slane %v1221, 2
    %v1226 = vperm.slane %v1221, 3
    %v1227 = vrot.slane %v1224, 4
    %v1228 = vrot.slane %v1226, 4
    %v1229 = vsel %vm76, %v1223, %v1227
    %v1230 = vsel %vm76, %v1225, %v1228
    %1231 = vrot.lane.b32.xlu0 %v1229, 32
    %v1232 = vpop.permute.xlu0 %1231
    %1233 = vrot.lane.b32.xlu0 %v1230, 32
    %v1234 = vpop.permute.xlu0 %1233
    %v1235 = vrot.slane %v1232, 4
    %v1236 = vrot.slane %v1234, 4
    %v1237 = vsel %vm474, %v1235, %v1232
    %v1238 = vsel %vm76, %v1235, %v1236
    %v1239 = vsel %vm474, %v1238, %v1234
    %v1243 = vmul.f32 %v1218, %v1237
    %v1244 = vmul.f32 %v1219, %v1239
    %v1245 = vmul.f32 %v1220, %v1236
    %1249 = vst [vmem:[#allocation1] ss:$2 sm:$0xff] %v1243
    %s1250 = scalar_lea.vmem [#allocation1], 16
    %1251 = vst [vmem:[%s1250] ss:$2 sm:$0xff] %v1244
    %s1252 = scalar_lea.vmem [#allocation1], 32
    %1253 = vst [vmem:[%s1252] ss:$2 sm:$0xff] %v1245
    %v1254 = vld.sshfl [vmem:[#allocation1] sm:$0xff pattern:$0x75316420]
    %v1255 = vld.sshfl [vmem:[#allocation1 + $0x8] sm:$0xff pattern:$0x75316420]
    %v1256 = vld.sshfl [vmem:[#allocation1 + $0x10] sm:$0xff pattern:$0x75316420]
    %v1257 = vld.sshfl [vmem:[#allocation1 + $0x18] sm:$0xff pattern:$0x75316420]
    %v1258 = vld.sshfl [vmem:[#allocation1 + $0x20] sm:$0xff pattern:$0x75316420]
    %1259 = vrot.lane.b32.xlu0 %v1254, 96
    %v1260 = vpop.permute.xlu0 %1259
    %1261 = vrot.lane.b32.xlu0 %v1255, 96
    %v1262 = vpop.permute.xlu0 %1261
    %1263 = vrot.lane.b32.xlu0 %v1256, 96
    %v1264 = vpop.permute.xlu0 %1263
    %1265 = vrot.lane.b32.xlu0 %v1257, 96
    %v1266 = vpop.permute.xlu0 %1265
    %1267 = vrot.lane.b32.xlu0 %v1258, 96
    %v1268 = vpop.permute.xlu0 %1267
    %v1269 = vsel %vm507, %v1260, %v1262
    %v1270 = vsel %vm507, %v1262, %v1264
    %v1271 = vsel %vm507, %v1264, %v1266
    %v1272 = vsel %vm507, %v1266, %v1268
    %1277 = vst [vmem:[#allocation3 + $0x60] sm:$0xf] %v1269
    %1278 = vst [vmem:[#allocation3 + $0x68] sm:$0xf] %v1270
    %1279 = vst [vmem:[#allocation3 + $0x70] sm:$0xf] %v1271
    %1280 = vst [vmem:[#allocation3 + $0x78] sm:$0xf] %v1272
    %v1281 = vld [vmem:[#allocation2] sm:$0xff]
    %v1282 = vld [vmem:[#allocation2 + $0x8] sm:$0xff]
    %v1283 = vld [vmem:[#allocation2 + $0x10] sm:$0xf]
    %v1284 = vld [vmem:[%s523] ss:$8 sm:$0xf]
    %v1286 = vperm.slane %v1284, 0
    %v1287 = vperm.slane %v1284, 1
    %v1288 = vperm.slane %v1284, 2
    %v1289 = vperm.slane %v1284, 3
    %v1290 = vrot.slane %v1287, 4
    %v1291 = vrot.slane %v1289, 4
    %v1292 = vsel %vm76, %v1286, %v1290
    %v1293 = vsel %vm76, %v1288, %v1291
    %1294 = vrot.lane.b32.xlu0 %v1292, 33
    %v1295 = vpop.permute.xlu0 %1294
    %1296 = vrot.lane.b32.xlu0 %v1293, 33
    %v1297 = vpop.permute.xlu0 %1296
    %v1298 = vrot.slane %v1295, 4
    %v1299 = vrot.slane %v1297, 4
    %v1300 = vsel %vm540, %v1298, %v1295
    %v1301 = vsel %vm76, %v1298, %v1299
    %v1302 = vsel %vm540, %v1301, %v1297
    %v1306 = vmul.f32 %v1281, %v1300
    %v1307 = vmul.f32 %v1282, %v1302
    %v1308 = vmul.f32 %v1283, %v1299
    %s1312 = scalar_lea.vmem [#allocation1], 1
    %1313 = vst [vmem:[%s1312] ss:$2 sm:$0xff] %v1306
    %s1314 = scalar_lea.vmem [#allocation1], 17
    %1315 = vst [vmem:[%s1314] ss:$2 sm:$0xff] %v1307
    %s1316 = scalar_lea.vmem [#allocation1], 33
    %1317 = vst [vmem:[%s1316] ss:$2 sm:$0xff] %v1308
    %v1318 = vld.sshfl [vmem:[#allocation1] sm:$0xff pattern:$0x75316420]
    %v1319 = vld.sshfl [vmem:[#allocation1 + $0x8] sm:$0xff pattern:$0x75316420]
    %v1320 = vld.sshfl [vmem:[#allocation1 + $0x10] sm:$0xff pattern:$0x75316420]
    %v1321 = vld.sshfl [vmem:[#allocation1 + $0x18] sm:$0xff pattern:$0x75316420]
    %v1322 = vld.sshfl [vmem:[#allocation1 + $0x20] sm:$0xff pattern:$0x75316420]
    %1323 = vrot.lane.b32.xlu0 %v1318, 95
    %v1324 = vpop.permute.xlu0 %1323
    %1325 = vrot.lane.b32.xlu0 %v1319, 95
    %v1326 = vpop.permute.xlu0 %1325
    %1327 = vrot.lane.b32.xlu0 %v1320, 95
    %v1328 = vpop.permute.xlu0 %1327
    %1329 = vrot.lane.b32.xlu0 %v1321, 95
    %v1330 = vpop.permute.xlu0 %1329
    %1331 = vrot.lane.b32.xlu0 %v1322, 95
    %v1332 = vpop.permute.xlu0 %1331
    %v1333 = vsel %vm574, %v1324, %v1326
    %v1334 = vsel %vm574, %v1326, %v1328
    %v1335 = vsel %vm574, %v1328, %v1330
    %v1336 = vsel %vm574, %v1330, %v1332
    %1341 = vst [vmem:[#allocation3 + $0x60] sm:$0xf0] %v1333
    %1342 = vst [vmem:[#allocation3 + $0x68] sm:$0xf0] %v1334
    %1343 = vst [vmem:[#allocation3 + $0x70] sm:$0xf0] %v1335
    %1344 = vst [vmem:[#allocation3 + $0x78] sm:$0xf0] %v1336
    %v1345 = vld [vmem:[#allocation2] sm:$0xff]
    %v1346 = vld [vmem:[#allocation2 + $0x8] sm:$0xff]
    %v1347 = vld [vmem:[#allocation2 + $0x10] sm:$0xf]
    %v1348 = vld [vmem:[%s590] ss:$8 sm:$0xf]
    %v1350 = vperm.slane %v1348, 0
    %v1351 = vperm.slane %v1348, 1
    %v1352 = vperm.slane %v1348, 2
    %v1353 = vperm.slane %v1348, 3
    %v1354 = vrot.slane %v1351, 4
    %v1355 = vrot.slane %v1353, 4
    %v1356 = vsel %vm76, %v1350, %v1354
    %v1357 = vsel %vm76, %v1352, %v1355
    %1358 = vrot.lane.b32.xlu0 %v1356, 34
    %v1359 = vpop.permute.xlu0 %1358
    %1360 = vrot.lane.b32.xlu0 %v1357, 34
    %v1361 = vpop.permute.xlu0 %1360
    %v1362 = vrot.slane %v1359, 4
    %v1363 = vrot.slane %v1361, 4
    %v1364 = vsel %vm607, %v1362, %v1359
    %v1365 = vsel %vm76, %v1362, %v1363
    %v1366 = vsel %vm607, %v1365, %v1361
    %v1370 = vmul.f32 %v1345, %v1364
    %v1371 = vmul.f32 %v1346, %v1366
    %v1372 = vmul.f32 %v1347, %v1363
    %1376 = vst [vmem:[#allocation1] ss:$2 sm:$0xff] %v1370
    %s1377 = scalar_lea.vmem [#allocation1], 16
    %1378 = vst [vmem:[%s1377] ss:$2 sm:$0xff] %v1371
    %s1379 = scalar_lea.vmem [#allocation1], 32
    %1380 = vst [vmem:[%s1379] ss:$2 sm:$0xff] %v1372
    %v1381 = vld.sshfl [vmem:[#allocation1] sm:$0xff pattern:$0x75316420]
    %v1382 = vld.sshfl [vmem:[#allocation1 + $0x8] sm:$0xff pattern:$0x75316420]
    %v1383 = vld.sshfl [vmem:[#allocation1 + $0x10] sm:$0xff pattern:$0x75316420]
    %v1384 = vld.sshfl [vmem:[#allocation1 + $0x18] sm:$0xff pattern:$0x75316420]
    %v1385 = vld.sshfl [vmem:[#allocation1 + $0x20] sm:$0xff pattern:$0x75316420]
    %1386 = vrot.lane.b32.xlu0 %v1381, 94
    %v1387 = vpop.permute.xlu0 %1386
    %1388 = vrot.lane.b32.xlu0 %v1382, 94
    %v1389 = vpop.permute.xlu0 %1388
    %1390 = vrot.lane.b32.xlu0 %v1383, 94
    %v1391 = vpop.permute.xlu0 %1390
    %1392 = vrot.lane.b32.xlu0 %v1384, 94
    %v1393 = vpop.permute.xlu0 %1392
    %1394 = vrot.lane.b32.xlu0 %v1385, 94
    %v1395 = vpop.permute.xlu0 %1394
    %v1396 = vsel %vm640, %v1387, %v1389
    %v1397 = vsel %vm640, %v1389, %v1391
    %v1398 = vsel %vm640, %v1391, %v1393
    %v1399 = vsel %vm640, %v1393, %v1395
    %1404 = vst [vmem:[#allocation3 + $0x80] sm:$0xf] %v1396
    %1405 = vst [vmem:[#allocation3 + $0x88] sm:$0xf] %v1397
    %1406 = vst [vmem:[#allocation3 + $0x90] sm:$0xf] %v1398
    %1407 = vst [vmem:[#allocation3 + $0x98] sm:$0xf] %v1399
    %v1408 = vld [vmem:[%s3] sm:$0xf]
    %v1409 = vld [vmem:[#allocation3] sm:$0xff]
    %v1410 = vld [vmem:[#allocation3 + $0x8] sm:$0xff]
    %v1411 = vld [vmem:[#allocation3 + $0x10] sm:$0xff]
    %v1412 = vld [vmem:[#allocation3 + $0x18] sm:$0xff]
    %v1413 = vld [vmem:[#allocation3 + $0x20] sm:$0xff]
    %v1414 = vld [vmem:[#allocation3 + $0x28] sm:$0xff]
    %v1415 = vld [vmem:[#allocation3 + $0x30] sm:$0xff]
    %v1416 = vld [vmem:[#allocation3 + $0x38] sm:$0xff]
    %v1417 = vld [vmem:[#allocation3 + $0x40] sm:$0xff]
    %v1418 = vld [vmem:[#allocation3 + $0x48] sm:$0xff]
    %v1419 = vld [vmem:[#allocation3 + $0x50] sm:$0xff]
    %v1420 = vld [vmem:[#allocation3 + $0x58] sm:$0xff]
    %v1421 = vld [vmem:[#allocation3 + $0x60] sm:$0xff]
    %v1422 = vld [vmem:[#allocation3 + $0x68] sm:$0xff]
    %v1423 = vld [vmem:[#allocation3 + $0x70] sm:$0xff]
    %v1424 = vld [vmem:[#allocation3 + $0x78] sm:$0xff]
    %v1425 = vld [vmem:[#allocation3 + $0x80] sm:$0xf]
    %v1426 = vld [vmem:[#allocation3 + $0x88] sm:$0xf]
    %v1427 = vld [vmem:[#allocation3 + $0x90] sm:$0xf]
    %v1428 = vld [vmem:[#allocation3 + $0x98] sm:$0xf]
    %v1430 = vsel %vm674, %v1408, 0
    %v1433 = vsel %vm76, %v1425, 0
    %v1436 = vsel %vm76, %v1426, 0
    %v1439 = vsel %vm76, %v1427, 0
    %v1442 = vsel %vm76, %v1428, 0
    %1444 = vmatpush.msra.mxu0 0.0
    %1445 = vmatpush.msra.mxu0 0.0
    %1446 = vmatpush.msra.mxu0 0.0
    %1447 = vmatpush.msra.mxu0 0.0
    %1448 = vmatpush.msra.mxu0 0.0
    %1449 = vmatpush.msra.mxu0 0.0
    %1450 = vmatpush.msra.mxu0 0.0
    %1451 = vmatpush.msra.mxu0 0.0
    %1452 = vmatpush.msra.mxu0 0.0
    %1453 = vmatpush.msra.mxu0 0.0
    %1454 = vmatpush.msra.mxu0 0.0
    %1455 = vmatpush.msra.mxu0 %v1433
    %1456 = vmatpush.msra.mxu0 %v1421
    %1457 = vmatpush.msra.mxu0 %v1417
    %1458 = vmatpush.msra.mxu0 %v1413
    %1459 = vmatpush.msra.mxu0 %v1409
    %1460 = vmatmul.f32.gmra.mxu0 %v1430
    %v1461 = vpop.f32.mrf.mxu0
    %v1462 = vadd.f32 0.0, %v1461
    %1463 = vdwg.mxu0
    %1464 = vmatpush.msra.mxu0 0.0
    %1465 = vmatpush.msra.mxu0 0.0
    %1466 = vmatpush.msra.mxu0 0.0
    %1467 = vmatpush.msra.mxu0 0.0
    %1468 = vmatpush.msra.mxu0 0.0
    %1469 = vmatpush.msra.mxu0 0.0
    %1470 = vmatpush.msra.mxu0 0.0
    %1471 = vmatpush.msra.mxu0 0.0
    %1472 = vmatpush.msra.mxu0 0.0
    %1473 = vmatpush.msra.mxu0 0.0
    %1474 = vmatpush.msra.mxu0 0.0
    %1475 = vmatpush.msra.mxu0 %v1436
    %1476 = vmatpush.msra.mxu0 %v1422
    %1477 = vmatpush.msra.mxu0 %v1418
    %1478 = vmatpush.msra.mxu0 %v1414
    %1479 = vmatpush.msra.mxu0 %v1410
    %1480 = vmatmul.f32.gmra.mxu0 %v1430
    %v1481 = vpop.f32.mrf.mxu0
    %v1482 = vadd.f32 0.0, %v1481
    %1483 = vdwg.mxu0
    %1484 = vmatpush.msra.mxu0 0.0
    %1485 = vmatpush.msra.mxu0 0.0
    %1486 = vmatpush.msra.mxu0 0.0
    %1487 = vmatpush.msra.mxu0 0.0
    %1488 = vmatpush.msra.mxu0 0.0
    %1489 = vmatpush.msra.mxu0 0.0
    %1490 = vmatpush.msra.mxu0 0.0
    %1491 = vmatpush.msra.mxu0 0.0
    %1492 = vmatpush.msra.mxu0 0.0
    %1493 = vmatpush.msra.mxu0 0.0
    %1494 = vmatpush.msra.mxu0 0.0
    %1495 = vmatpush.msra.mxu0 %v1439
    %1496 = vmatpush.msra.mxu0 %v1423
    %1497 = vmatpush.msra.mxu0 %v1419
    %1498 = vmatpush.msra.mxu0 %v1415
    %1499 = vmatpush.msra.mxu0 %v1411
    %1500 = vmatmul.f32.gmra.mxu0 %v1430
    %v1501 = vpop.f32.mrf.mxu0
    %v1502 = vadd.f32 0.0, %v1501
    %1503 = vdwg.mxu0
    %1504 = vmatpush.msra.mxu0 0.0
    %1505 = vmatpush.msra.mxu0 0.0
    %1506 = vmatpush.msra.mxu0 0.0
    %1507 = vmatpush.msra.mxu0 0.0
    %1508 = vmatpush.msra.mxu0 0.0
    %1509 = vmatpush.msra.mxu0 0.0
    %1510 = vmatpush.msra.mxu0 0.0
    %1511 = vmatpush.msra.mxu0 0.0
    %1512 = vmatpush.msra.mxu0 0.0
    %1513 = vmatpush.msra.mxu0 0.0
    %1514 = vmatpush.msra.mxu0 0.0
    %1515 = vmatpush.msra.mxu0 %v1442
    %1516 = vmatpush.msra.mxu0 %v1424
    %1517 = vmatpush.msra.mxu0 %v1420
    %1518 = vmatpush.msra.mxu0 %v1416
    %1519 = vmatpush.msra.mxu0 %v1412
    %1520 = vmatmul.f32.gmra.mxu0 %v1430
    %v1521 = vpop.f32.mrf.mxu0
    %v1522 = vadd.f32 0.0, %v1521
    %1523 = vdwg.mxu0
    %v1524 = vsel %vm76, %v1462, 0.0
    %v1525 = vsel %vm76, %v1482, 0.0
    %v1526 = vadd.f32 %v1524, %v1525
    %v1527 = vsel %vm76, %v1502, 0.0
    %v1528 = vadd.f32 %v1526, %v1527
    %v1529 = vsel %vm76, %v1522, 0.0
    %v1530 = vadd.f32 %v1528, %v1529
    %1531 = vadd.xlane.f32.xlu0 %v1530
    %v1532 = vpop.xlane.xlu0 %1531
    %v1533 = vmul.f32 %v1532, %v785
    %v1534 = vsub.f32 %v1462, %v1533
    %v1535 = vsub.f32 %v1482, %v1533
    %v1536 = vsub.f32 %v1502, %v1533
    %v1537 = vsub.f32 %v1522, %v1533
    %v1538 = vmul.f32 %v1534, %v1534
    %v1539 = vmul.f32 %v1535, %v1535
    %v1540 = vmul.f32 %v1536, %v1536
    %v1541 = vmul.f32 %v1537, %v1537
    %v1542 = vsel %vm76, %v1538, 0.0
    %v1543 = vsel %vm76, %v1539, 0.0
    %v1544 = vadd.f32 %v1542, %v1543
    %v1545 = vsel %vm76, %v1540, 0.0
    %v1546 = vadd.f32 %v1544, %v1545
    %v1547 = vsel %vm76, %v1541, 0.0
    %v1548 = vadd.f32 %v1546, %v1547
    %1549 = vadd.xlane.f32.xlu0 %v1548
    %v1550 = vpop.xlane.xlu0 %1549
    %v1551 = vmul.f32 %v1550, %v785
    %v1552 = vadd.f32 %v1551, 1e-05
    %v1553 = vrsqrt.pop %v1552
    %v1554 = vmul.f32 %v1553, %v1552
    %v1555 = vmul.f32 %v1554, %v1553
    %v1556 = vmul.f32 0.5, %v1555
    %v1557 = vsub.f32 1.5, %v1556
    %v1558 = vmul.f32 %v1553, %v1557
    %vm1559 = vweird.f32 %v1552
    %vm1560 = vweird.f32 %v1553
    %vm1561 = vmor %vm1559, %vm1560
    %v1562 = vsel %vm1561, %v1553, %v1558
    %v1563 = vmul.f32 %v1534, %v1562
    %v1564 = vmul.f32 %v1535, %v1562
    %v1565 = vmul.f32 %v1536, %v1562
    %v1566 = vmul.f32 %v1537, %v1562
    %v1567 = vld [vmem:[%s6] sm:$0xf]
    %1569 = vset.pattern.permute.xlu0 0
    %1570 = vperm.xlu0 %1569, %v1567
    %v1571 = vpop.permute.xlu0 %1570
    %v1573 = vmul.f32 %v1563, %v1571
    %v1574 = vmul.f32 %v1564, %v1571
    %v1575 = vmul.f32 %v1565, %v1571
    %v1576 = vmul.f32 %v1566, %v1571
    %v1577 = vld [vmem:[%s7] sm:$0xf]
    %1579 = vset.pattern.permute.xlu0 0
    %1580 = vperm.xlu0 %1579, %v1577
    %v1581 = vpop.permute.xlu0 %1580
    %v1583 = vadd.f32 %v1573, %v1581
    %v1584 = vadd.f32 %v1574, %v1581
    %v1585 = vadd.f32 %v1575, %v1581
    %v1586 = vadd.f32 %v1576, %v1581
    %1587 = vst [vmem:[#allocation1] ss:$2 sm:$0xff] %v64
    %s1588 = scalar_lea.vmem [#allocation1], 16
    %1589 = vst [vmem:[%s1588] ss:$2 sm:$0xff] %v65
    %v1590 = vld.sshfl [vmem:[#allocation1] sm:$0xff pattern:$0x75316420]
    %v1591 = vld.sshfl [vmem:[#allocation1 + $0x8] sm:$0xff pattern:$0x75316420]
    %v1592 = vld.sshfl [vmem:[#allocation1 + $0x10] sm:$0xff pattern:$0x75316420]
    %v1593 = vld.sshfl [vmem:[#allocation1 + $0x18] sm:$0xff pattern:$0x75316420]
    %v1598 = vadd.f32 %v1583, %v1590
    %v1599 = vadd.f32 %v1584, %v1591
    %v1600 = vadd.f32 %v1585, %v1592
    %v1601 = vadd.f32 %v1586, %v1593
    %v1602 = vmax.f32 %v1598, 0.0
    %v1603 = vmax.f32 %v1599, 0.0
    %v1604 = vmax.f32 %v1600, 0.0
    %v1605 = vmax.f32 %v1601, 0.0
    %v1610 = vrot.slane %v1603, 4
    %v1611 = vrot.slane %v1605, 4
    %v1612 = vsel %vm76, %v1602, %v1610
    %v1613 = vsel %vm76, %v1604, %v1611
    %1616 = vst [vmem:[#allocation9] sm:$0xff] %v1612
    %1617 = vst [vmem:[#allocation9 + $0x8] sm:$0xff] %v1613
    // Predicated region
    $region42: #{tpu_custom_call.1} parent=1 // pred_check
      _
    $region43: #{tpu_custom_call.1} parent=1 // pred_check_branch
      %1619 = sbr.rel (0) target = $region45
    $region44: #{tpu_custom_call.1} parent=1 // pred_region
      %1621 = vsyncadd [#allocation6], 0
      %s1623 = sshll.u32 [#allocation9], 4
      %s1624 = int_to_ptr.vmem [resolvable:$true] %s1623
      %s1625 = sshll.u32 %s8, 4
      %s1626 = int_to_ptr.hbm [resolvable:$true] %s1625
      %1628 = dma.vmem_to_hbm [thread:$0]  %s1624, 256, %s1626, [#allocation6]
    $region45: #{tpu_custom_call.1} parent=1 // pred_fallthru
      _
    // Predicated region
    $region46: #{tpu_custom_call.1} parent=1 // pred_check
      _
    $region47: #{tpu_custom_call.1} parent=1 // pred_check_branch
      %1630 = sbr.rel (0) target = $region49
    $region48: #{tpu_custom_call.1} parent=1 // pred_region
      %1632 = dma.done [#allocation6], 256
    $region49: #{tpu_custom_call.1} parent=1 // pred_fallthru
      _
    %1633 = vsyncpa [#allocation5], 1
    %1634 = vsyncpa [#allocation8], 1
    %1635 = vsyncpa [#allocation6], 1

</llo_original>
